<compile_context>
chip_gen: v5e
topology: v5e:2x2
jax: 0.10.0
libtpu: 0.0.40
codegen_flags: <defaults>
</compile_context>

<pallas_src>
import functools

import jax
import jax.numpy as jnp
from jax.experimental import pallas as pl
from jax.experimental.pallas import tpu as pltpu


# ----------------------------------------------------------------------------
# Fused kernel factory: N-layer LSTM recurrence + fc head, all VMEM-resident.
# ----------------------------------------------------------------------------
def _make_fused_lstm_fc_kernel(num_layers, seq_len, batch, hidden_size,
                               out_steps):
    T, B, H = seq_len, batch, hidden_size

    def kernel(*refs):
        # Argument layout:
        #   refs[0]                      : x (T*B, F) time-major rows
        #   refs[1 + 3l .. 3 + 3l]       : layer l (W_ih^T, W_hh^T, b_ih+b_hh)
        #   refs[1 + 3L], refs[2 + 3L]   : fc W^T (H, C), fc b (1, C)
        #   refs[3 + 3L]                 : out (out_steps*B, C)
        #   refs[4 + 3L]                 : act scratch (T*B, H)  [VMEM]
        x_ref = refs[0]
        layer_refs = [tuple(refs[1 + 3 * l: 4 + 3 * l])
                      for l in range(num_layers)]
        fcw_ref = refs[1 + 3 * num_layers]
        fcb_ref = refs[2 + 3 * num_layers]
        out_ref = refs[3 + 3 * num_layers]
        act_ref = refs[4 + 3 * num_layers]

        for layer_idx, (wih_ref, whh_ref, b_ref) in enumerate(layer_refs):
            # Input to this layer: raw input rows for layer 0, otherwise the
            # previous layer's hidden states (still resident in VMEM scratch).
            inp = x_ref[...] if layer_idx == 0 else act_ref[...]  # (T*B, F_l)

            # Bulk input->hidden precompute for ALL timesteps in one MXU
            # matmul.  PyTorch gate order [i, f, g, o]; bias = b_ih + b_hh.
            pre = (jnp.dot(inp, wih_ref[...],
                           preferred_element_type=jnp.float32)
                   + b_ref[...])                                  # (T*B, 4H)

            whh = whh_ref[...]        # hoisted: reused every timestep

            h = jnp.zeros((B, H), jnp.float32)
            c = jnp.zeros((B, H), jnp.float32)
            # Static unroll: the recurrence is inherently sequential and T is
            # a compile-time constant; static offsets keep every slice/store
            # simple (no dynamic sublane indexing).
            for t in range(T):
                gates = pre[t * B:(t + 1) * B, :] + jnp.dot(
                    h, whh, preferred_element_type=jnp.float32)   # (B, 4H)
                i_g = jax.nn.sigmoid(gates[:, 0 * H:1 * H])
                f_g = jax.nn.sigmoid(gates[:, 1 * H:2 * H])
                g_g = jnp.tanh(gates[:, 2 * H:3 * H])
                o_g = jax.nn.sigmoid(gates[:, 3 * H:4 * H])
                c = f_g * c + i_g * g_g
                h = o_g * jnp.tanh(c)
                act_ref[t * B:(t + 1) * B, :] = h

        # Fused fc head on the last `out_steps` timesteps (still in VMEM),
        # then a single bulk store of the whole result.
        act = act_ref[...]
        tail = act[(T - out_steps) * B:, :]                       # (size*B, H)
        out_ref[...] = (jnp.dot(tail, fcw_ref[...],
                                preferred_element_type=jnp.float32)
                        + fcb_ref[...]).astype(out_ref.dtype)

    return kernel


# ----------------------------------------------------------------------------
# Full model: N-layer LSTM (batch_first) + Linear head, zero initial state.
# ----------------------------------------------------------------------------
class LSTMModelPallas:
    def __init__(self, num_classes, input_size, num_layers, hidden_size, key):
        self.num_classes = num_classes
        self.input_size = input_size
        self.num_layers = num_layers
        self.hidden_size = hidden_size

        H = hidden_size
        bound = 1.0 / float(H) ** 0.5
        self.w_ih_t = []   # (F_l, 4H)  = W_ih^T
        self.w_hh_t = []   # (H, 4H)    = W_hh^T
        self.b = []        # (1, 4H)    = b_ih + b_hh
        for layer in range(num_layers):
            f_in = input_size if layer == 0 else H
            key, k1, k2, k3, k4 = jax.random.split(key, 5)
            w_ih = jax.random.uniform(k1, (4 * H, f_in), jnp.float32,
                                      -bound, bound)
            w_hh = jax.random.uniform(k2, (4 * H, H), jnp.float32,
                                      -bound, bound)
            b_ih = jax.random.uniform(k3, (4 * H,), jnp.float32, -bound, bound)
            b_hh = jax.random.uniform(k4, (4 * H,), jnp.float32, -bound, bound)
            self.w_ih_t.append(w_ih.T)
            self.w_hh_t.append(w_hh.T)
            self.b.append((b_ih + b_hh).reshape(1, 4 * H))

        key, k1, k2 = jax.random.split(key, 3)
        fc_bound = 1.0 / float(H) ** 0.5
        fc_w = jax.random.uniform(k1, (num_classes, H), jnp.float32,
                                  -fc_bound, fc_bound)
        fc_b = jax.random.uniform(k2, (num_classes,), jnp.float32,
                                  -fc_bound, fc_bound)
        self.fc_w_t = fc_w.T                    # (H, C)
        self.fc_b = fc_b.reshape(1, num_classes)

    def __call__(self, x):
        # x: (B, T, input_size) float32  (PyTorch batch_first convention)
        B, T, _ = x.shape
        H, C = self.hidden_size, self.num_classes
        size = T // 4

        # batch_first -> time-major rows (row index = t*B + b); tiny op.
        x_tm = jnp.transpose(x, (1, 0, 2)).reshape(T * B, -1).astype(
            jnp.float32)

        kernel = _make_fused_lstm_fc_kernel(self.num_layers, T, B, H, size)

        args = [x_tm]
        for l in range(self.num_layers):
            args += [self.w_ih_t[l], self.w_hh_t[l], self.b[l]]
        args += [self.fc_w_t, self.fc_b]

        flat = pl.pallas_call(
            kernel,
            out_shape=jax.ShapeDtypeStruct((size * B, C), jnp.float32),
            scratch_shapes=[pltpu.VMEM((T * B, H), jnp.float32)],
        )(*args)

        scores = jnp.transpose(flat.reshape(size, B, C), (1, 0, 2))  # (B,size,C)
        # torch .squeeze(0): only squeezes when batch == 1
        if B == 1:
            scores = scores[0]
        return scores


if __name__ == "__main__":
    # Small shapes consistent with the module's forward pass.
    batch = 2
    seq_len = 8
    input_size = 64
    hidden_size = 32
    num_layers = 3
    num_classes = 4

    key = jax.random.PRNGKey(0)
    key, xkey, pkey = jax.random.split(key, 3)
    x = jax.random.normal(xkey, (batch, seq_len, input_size), jnp.float32)

    model = LSTMModelPallas(num_classes, input_size, num_layers,
                            hidden_size, pkey)
    scores = model(x)
    jax.block_until_ready(scores)

    expected_shape = (batch, seq_len // 4, num_classes)
    assert scores.shape == expected_shape, (scores.shape, expected_shape)
    print("KERNEL_OK")
</pallas_src>

<mosaic_0001>
module attributes {stable_mosaic.version = 11 : i64} {
  func.func @kernel(%arg0: memref<16x64xf32, #tpu.memory_space<vmem>>, %arg1: memref<64x128xf32, #tpu.memory_space<vmem>>, %arg2: memref<32x128xf32, #tpu.memory_space<vmem>>, %arg3: memref<1x128xf32, #tpu.memory_space<vmem>>, %arg4: memref<32x128xf32, #tpu.memory_space<vmem>>, %arg5: memref<32x128xf32, #tpu.memory_space<vmem>>, %arg6: memref<1x128xf32, #tpu.memory_space<vmem>>, %arg7: memref<32x128xf32, #tpu.memory_space<vmem>>, %arg8: memref<32x128xf32, #tpu.memory_space<vmem>>, %arg9: memref<1x128xf32, #tpu.memory_space<vmem>>, %arg10: memref<32x4xf32, #tpu.memory_space<vmem>>, %arg11: memref<1x4xf32, #tpu.memory_space<vmem>>, %arg12: memref<4x4xf32, #tpu.memory_space<vmem>>, %arg13: memref<16x32xf32, #tpu.memory_space<vmem>>) attributes {dimension_semantics = [], scalar_prefetch = 0 : i64, scratch_operands = 1 : i64, tpu.core_type = #tpu.core_type<tc>} {
    %c0 = arith.constant 0 : index
    %c0_0 = arith.constant 0 : index
    %0 = vector.load %arg0[%c0, %c0_0] : memref<16x64xf32, #tpu.memory_space<vmem>>, vector<16x64xf32>
    %c0_1 = arith.constant 0 : index
    %c0_2 = arith.constant 0 : index
    %1 = vector.load %arg1[%c0_1, %c0_2] : memref<64x128xf32, #tpu.memory_space<vmem>>, vector<64x128xf32>
    %cst = arith.constant dense<0.000000e+00> : vector<16x128xf32>
    %2 = tpu.matmul %0, %1, %cst {dimension_numbers = #tpu.dot_dimension_numbers<[1], [0], [0], [1], [0, 0, 1, 1], [], []>} : vector<16x64xf32>, vector<64x128xf32>, vector<16x128xf32> -> vector<16x128xf32>
    %c0_3 = arith.constant 0 : index
    %c0_4 = arith.constant 0 : index
    %3 = vector.load %arg3[%c0_3, %c0_4] : memref<1x128xf32, #tpu.memory_space<vmem>>, vector<1x128xf32>
    %4 = vector.broadcast %3 : vector<1x128xf32> to vector<16x128xf32>
    %5 = arith.addf %2, %4 : vector<16x128xf32>
    %c0_5 = arith.constant 0 : index
    %c0_6 = arith.constant 0 : index
    %6 = vector.load %arg2[%c0_5, %c0_6] : memref<32x128xf32, #tpu.memory_space<vmem>>, vector<32x128xf32>
    %cst_7 = arith.constant 0.000000e+00 : f32
    %7 = vector.broadcast %cst_7 : f32 to vector<2x32xf32>
    %cst_8 = arith.constant 0.000000e+00 : f32
    %8 = vector.broadcast %cst_8 : f32 to vector<2x32xf32>
    %9 = vector.extract_strided_slice %5 {offsets = [0, 0], sizes = [2, 128], strides = [1, 1]} : vector<16x128xf32> to vector<2x128xf32>
    %cst_9 = arith.constant dense<0.000000e+00> : vector<2x128xf32>
    %10 = tpu.matmul %7, %6, %cst_9 {dimension_numbers = #tpu.dot_dimension_numbers<[1], [0], [0], [1], [0, 0, 1, 1], [], []>} : vector<2x32xf32>, vector<32x128xf32>, vector<2x128xf32> -> vector<2x128xf32>
    %11 = arith.addf %9, %10 : vector<2x128xf32>
    %12 = vector.extract_strided_slice %11 {offsets = [0, 0], sizes = [2, 32], strides = [1, 1]} : vector<2x128xf32> to vector<2x32xf32>
    %13 = arith.negf %12 : vector<2x32xf32>
    %14 = math.exp %13 : vector<2x32xf32>
    %cst_10 = arith.constant 1.000000e+00 : f32
    %15 = vector.broadcast %cst_10 : f32 to vector<2x32xf32>
    %16 = arith.addf %15, %14 : vector<2x32xf32>
    %17 = arith.divf %15, %16 : vector<2x32xf32>
    %18 = vector.extract_strided_slice %11 {offsets = [0, 32], sizes = [2, 32], strides = [1, 1]} : vector<2x128xf32> to vector<2x32xf32>
    %19 = arith.negf %18 : vector<2x32xf32>
    %20 = math.exp %19 : vector<2x32xf32>
    %cst_11 = arith.constant 1.000000e+00 : f32
    %21 = vector.broadcast %cst_11 : f32 to vector<2x32xf32>
    %22 = arith.addf %21, %20 : vector<2x32xf32>
    %23 = arith.divf %21, %22 : vector<2x32xf32>
    %24 = vector.extract_strided_slice %11 {offsets = [0, 64], sizes = [2, 32], strides = [1, 1]} : vector<2x128xf32> to vector<2x32xf32>
    %25 = math.tanh %24 : vector<2x32xf32>
    %26 = vector.extract_strided_slice %11 {offsets = [0, 96], sizes = [2, 32], strides = [1, 1]} : vector<2x128xf32> to vector<2x32xf32>
    %27 = arith.negf %26 : vector<2x32xf32>
    %28 = math.exp %27 : vector<2x32xf32>
    %cst_12 = arith.constant 1.000000e+00 : f32
    %29 = vector.broadcast %cst_12 : f32 to vector<2x32xf32>
    %30 = arith.addf %29, %28 : vector<2x32xf32>
    %31 = arith.divf %29, %30 : vector<2x32xf32>
    %32 = arith.mulf %23, %8 : vector<2x32xf32>
    %33 = arith.mulf %17, %25 : vector<2x32xf32>
    %34 = arith.addf %32, %33 : vector<2x32xf32>
    %35 = math.tanh %34 : vector<2x32xf32>
    %36 = arith.mulf %31, %35 : vector<2x32xf32>
    %c0_13 = arith.constant 0 : index
    %c0_14 = arith.constant 0 : index
    %37 = vector.load %arg13[%c0_13, %c0_14] : memref<16x32xf32, #tpu.memory_space<vmem>>, vector<2x32xf32>
    tpu.vector_store %arg13[%c0_13, %c0_14], %36 {strides = array<i32>} : memref<16x32xf32, #tpu.memory_space<vmem>>, vector<2x32xf32>,
    %38 = vector.extract_strided_slice %5 {offsets = [2, 0], sizes = [2, 128], strides = [1, 1]} : vector<16x128xf32> to vector<2x128xf32>
    %cst_15 = arith.constant dense<0.000000e+00> : vector<2x128xf32>
    %39 = tpu.matmul %36, %6, %cst_15 {dimension_numbers = #tpu.dot_dimension_numbers<[1], [0], [0], [1], [0, 0, 1, 1], [], []>} : vector<2x32xf32>, vector<32x128xf32>, vector<2x128xf32> -> vector<2x128xf32>
    %40 = arith.addf %38, %39 : vector<2x128xf32>
    %41 = vector.extract_strided_slice %40 {offsets = [0, 0], sizes = [2, 32], strides = [1, 1]} : vector<2x128xf32> to vector<2x32xf32>
    %42 = arith.negf %41 : vector<2x32xf32>
    %43 = math.exp %42 : vector<2x32xf32>
    %cst_16 = arith.constant 1.000000e+00 : f32
    %44 = vector.broadcast %cst_16 : f32 to vector<2x32xf32>
    %45 = arith.addf %44, %43 : vector<2x32xf32>
    %46 = arith.divf %44, %45 : vector<2x32xf32>
    %47 = vector.extract_strided_slice %40 {offsets = [0, 32], sizes = [2, 32], strides = [1, 1]} : vector<2x128xf32> to vector<2x32xf32>
    %48 = arith.negf %47 : vector<2x32xf32>
    %49 = math.exp %48 : vector<2x32xf32>
    %cst_17 = arith.constant 1.000000e+00 : f32
    %50 = vector.broadcast %cst_17 : f32 to vector<2x32xf32>
    %51 = arith.addf %50, %49 : vector<2x32xf32>
    %52 = arith.divf %50, %51 : vector<2x32xf32>
    %53 = vector.extract_strided_slice %40 {offsets = [0, 64], sizes = [2, 32], strides = [1, 1]} : vector<2x128xf32> to vector<2x32xf32>
    %54 = math.tanh %53 : vector<2x32xf32>
    %55 = vector.extract_strided_slice %40 {offsets = [0, 96], sizes = [2, 32], strides = [1, 1]} : vector<2x128xf32> to vector<2x32xf32>
    %56 = arith.negf %55 : vector<2x32xf32>
    %57 = math.exp %56 : vector<2x32xf32>
    %cst_18 = arith.constant 1.000000e+00 : f32
    %58 = vector.broadcast %cst_18 : f32 to vector<2x32xf32>
    %59 = arith.addf %58, %57 : vector<2x32xf32>
    %60 = arith.divf %58, %59 : vector<2x32xf32>
    %61 = arith.mulf %52, %34 : vector<2x32xf32>
    %62 = arith.mulf %46, %54 : vector<2x32xf32>
    %63 = arith.addf %61, %62 : vector<2x32xf32>
    %64 = math.tanh %63 : vector<2x32xf32>
    %65 = arith.mulf %60, %64 : vector<2x32xf32>
    %c2 = arith.constant 2 : index
    %c0_19 = arith.constant 0 : index
    %66 = vector.load %arg13[%c2, %c0_19] : memref<16x32xf32, #tpu.memory_space<vmem>>, vector<2x32xf32>
    tpu.vector_store %arg13[%c2, %c0_19], %65 {strides = array<i32>} : memref<16x32xf32, #tpu.memory_space<vmem>>, vector<2x32xf32>,
    %67 = vector.extract_strided_slice %5 {offsets = [4, 0], sizes = [2, 128], strides = [1, 1]} : vector<16x128xf32> to vector<2x128xf32>
    %cst_20 = arith.constant dense<0.000000e+00> : vector<2x128xf32>
    %68 = tpu.matmul %65, %6, %cst_20 {dimension_numbers = #tpu.dot_dimension_numbers<[1], [0], [0], [1], [0, 0, 1, 1], [], []>} : vector<2x32xf32>, vector<32x128xf32>, vector<2x128xf32> -> vector<2x128xf32>
    %69 = arith.addf %67, %68 : vector<2x128xf32>
    %70 = vector.extract_strided_slice %69 {offsets = [0, 0], sizes = [2, 32], strides = [1, 1]} : vector<2x128xf32> to vector<2x32xf32>
    %71 = arith.negf %70 : vector<2x32xf32>
    %72 = math.exp %71 : vector<2x32xf32>
    %cst_21 = arith.constant 1.000000e+00 : f32
    %73 = vector.broadcast %cst_21 : f32 to vector<2x32xf32>
    %74 = arith.addf %73, %72 : vector<2x32xf32>
    %75 = arith.divf %73, %74 : vector<2x32xf32>
    %76 = vector.extract_strided_slice %69 {offsets = [0, 32], sizes = [2, 32], strides = [1, 1]} : vector<2x128xf32> to vector<2x32xf32>
    %77 = arith.negf %76 : vector<2x32xf32>
    %78 = math.exp %77 : vector<2x32xf32>
    %cst_22 = arith.constant 1.000000e+00 : f32
    %79 = vector.broadcast %cst_22 : f32 to vector<2x32xf32>
    %80 = arith.addf %79, %78 : vector<2x32xf32>
    %81 = arith.divf %79, %80 : vector<2x32xf32>
    %82 = vector.extract_strided_slice %69 {offsets = [0, 64], sizes = [2, 32], strides = [1, 1]} : vector<2x128xf32> to vector<2x32xf32>
    %83 = math.tanh %82 : vector<2x32xf32>
    %84 = vector.extract_strided_slice %69 {offsets = [0, 96], sizes = [2, 32], strides = [1, 1]} : vector<2x128xf32> to vector<2x32xf32>
    %85 = arith.negf %84 : vector<2x32xf32>
    %86 = math.exp %85 : vector<2x32xf32>
    %cst_23 = arith.constant 1.000000e+00 : f32
    %87 = vector.broadcast %cst_23 : f32 to vector<2x32xf32>
    %88 = arith.addf %87, %86 : vector<2x32xf32>
    %89 = arith.divf %87, %88 : vector<2x32xf32>
    %90 = arith.mulf %81, %63 : vector<2x32xf32>
    %91 = arith.mulf %75, %83 : vector<2x32xf32>
    %92 = arith.addf %90, %91 : vector<2x32xf32>
    %93 = math.tanh %92 : vector<2x32xf32>
    %94 = arith.mulf %89, %93 : vector<2x32xf32>
    %c4 = arith.constant 4 : index
    %c0_24 = arith.constant 0 : index
    %95 = vector.load %arg13[%c4, %c0_24] : memref<16x32xf32, #tpu.memory_space<vmem>>, vector<2x32xf32>
    tpu.vector_store %arg13[%c4, %c0_24], %94 {strides = array<i32>} : memref<16x32xf32, #tpu.memory_space<vmem>>, vector<2x32xf32>,
    %96 = vector.extract_strided_slice %5 {offsets = [6, 0], sizes = [2, 128], strides = [1, 1]} : vector<16x128xf32> to vector<2x128xf32>
    %cst_25 = arith.constant dense<0.000000e+00> : vector<2x128xf32>
    %97 = tpu.matmul %94, %6, %cst_25 {dimension_numbers = #tpu.dot_dimension_numbers<[1], [0], [0], [1], [0, 0, 1, 1], [], []>} : vector<2x32xf32>, vector<32x128xf32>, vector<2x128xf32> -> vector<2x128xf32>
    %98 = arith.addf %96, %97 : vector<2x128xf32>
    %99 = vector.extract_strided_slice %98 {offsets = [0, 0], sizes = [2, 32], strides = [1, 1]} : vector<2x128xf32> to vector<2x32xf32>
    %100 = arith.negf %99 : vector<2x32xf32>
    %101 = math.exp %100 : vector<2x32xf32>
    %cst_26 = arith.constant 1.000000e+00 : f32
    %102 = vector.broadcast %cst_26 : f32 to vector<2x32xf32>
    %103 = arith.addf %102, %101 : vector<2x32xf32>
    %104 = arith.divf %102, %103 : vector<2x32xf32>
    %105 = vector.extract_strided_slice %98 {offsets = [0, 32], sizes = [2, 32], strides = [1, 1]} : vector<2x128xf32> to vector<2x32xf32>
    %106 = arith.negf %105 : vector<2x32xf32>
    %107 = math.exp %106 : vector<2x32xf32>
    %cst_27 = arith.constant 1.000000e+00 : f32
    %108 = vector.broadcast %cst_27 : f32 to vector<2x32xf32>
    %109 = arith.addf %108, %107 : vector<2x32xf32>
    %110 = arith.divf %108, %109 : vector<2x32xf32>
    %111 = vector.extract_strided_slice %98 {offsets = [0, 64], sizes = [2, 32], strides = [1, 1]} : vector<2x128xf32> to vector<2x32xf32>
    %112 = math.tanh %111 : vector<2x32xf32>
    %113 = vector.extract_strided_slice %98 {offsets = [0, 96], sizes = [2, 32], strides = [1, 1]} : vector<2x128xf32> to vector<2x32xf32>
    %114 = arith.negf %113 : vector<2x32xf32>
    %115 = math.exp %114 : vector<2x32xf32>
    %cst_28 = arith.constant 1.000000e+00 : f32
    %116 = vector.broadcast %cst_28 : f32 to vector<2x32xf32>
    %117 = arith.addf %116, %115 : vector<2x32xf32>
    %118 = arith.divf %116, %117 : vector<2x32xf32>
    %119 = arith.mulf %110, %92 : vector<2x32xf32>
    %120 = arith.mulf %104, %112 : vector<2x32xf32>
    %121 = arith.addf %119, %120 : vector<2x32xf32>
    %122 = math.tanh %121 : vector<2x32xf32>
    %123 = arith.mulf %118, %122 : vector<2x32xf32>
    %c6 = arith.constant 6 : index
    %c0_29 = arith.constant 0 : index
    %124 = vector.load %arg13[%c6, %c0_29] : memref<16x32xf32, #tpu.memory_space<vmem>>, vector<2x32xf32>
    tpu.vector_store %arg13[%c6, %c0_29], %123 {strides = array<i32>} : memref<16x32xf32, #tpu.memory_space<vmem>>, vector<2x32xf32>,
    %125 = vector.extract_strided_slice %5 {offsets = [8, 0], sizes = [2, 128], strides = [1, 1]} : vector<16x128xf32> to vector<2x128xf32>
    %cst_30 = arith.constant dense<0.000000e+00> : vector<2x128xf32>
    %126 = tpu.matmul %123, %6, %cst_30 {dimension_numbers = #tpu.dot_dimension_numbers<[1], [0], [0], [1], [0, 0, 1, 1], [], []>} : vector<2x32xf32>, vector<32x128xf32>, vector<2x128xf32> -> vector<2x128xf32>
    %127 = arith.addf %125, %126 : vector<2x128xf32>
    %128 = vector.extract_strided_slice %127 {offsets = [0, 0], sizes = [2, 32], strides = [1, 1]} : vector<2x128xf32> to vector<2x32xf32>
    %129 = arith.negf %128 : vector<2x32xf32>
    %130 = math.exp %129 : vector<2x32xf32>
    %cst_31 = arith.constant 1.000000e+00 : f32
    %131 = vector.broadcast %cst_31 : f32 to vector<2x32xf32>
    %132 = arith.addf %131, %130 : vector<2x32xf32>
    %133 = arith.divf %131, %132 : vector<2x32xf32>
    %134 = vector.extract_strided_slice %127 {offsets = [0, 32], sizes = [2, 32], strides = [1, 1]} : vector<2x128xf32> to vector<2x32xf32>
    %135 = arith.negf %134 : vector<2x32xf32>
    %136 = math.exp %135 : vector<2x32xf32>
    %cst_32 = arith.constant 1.000000e+00 : f32
    %137 = vector.broadcast %cst_32 : f32 to vector<2x32xf32>
    %138 = arith.addf %137, %136 : vector<2x32xf32>
    %139 = arith.divf %137, %138 : vector<2x32xf32>
    %140 = vector.extract_strided_slice %127 {offsets = [0, 64], sizes = [2, 32], strides = [1, 1]} : vector<2x128xf32> to vector<2x32xf32>
    %141 = math.tanh %140 : vector<2x32xf32>
    %142 = vector.extract_strided_slice %127 {offsets = [0, 96], sizes = [2, 32], strides = [1, 1]} : vector<2x128xf32> to vector<2x32xf32>
    %143 = arith.negf %142 : vector<2x32xf32>
    %144 = math.exp %143 : vector<2x32xf32>
    %cst_33 = arith.constant 1.000000e+00 : f32
    %145 = vector.broadcast %cst_33 : f32 to vector<2x32xf32>
    %146 = arith.addf %145, %144 : vector<2x32xf32>
    %147 = arith.divf %145, %146 : vector<2x32xf32>
    %148 = arith.mulf %139, %121 : vector<2x32xf32>
    %149 = arith.mulf %133, %141 : vector<2x32xf32>
    %150 = arith.addf %148, %149 : vector<2x32xf32>
    %151 = math.tanh %150 : vector<2x32xf32>
    %152 = arith.mulf %147, %151 : vector<2x32xf32>
    %c8 = arith.constant 8 : index
    %c0_34 = arith.constant 0 : index
    %153 = vector.load %arg13[%c8, %c0_34] : memref<16x32xf32, #tpu.memory_space<vmem>>, vector<2x32xf32>
    tpu.vector_store %arg13[%c8, %c0_34], %152 {strides = array<i32>} : memref<16x32xf32, #tpu.memory_space<vmem>>, vector<2x32xf32>,
    %154 = vector.extract_strided_slice %5 {offsets = [10, 0], sizes = [2, 128], strides = [1, 1]} : vector<16x128xf32> to vector<2x128xf32>
    %cst_35 = arith.constant dense<0.000000e+00> : vector<2x128xf32>
    %155 = tpu.matmul %152, %6, %cst_35 {dimension_numbers = #tpu.dot_dimension_numbers<[1], [0], [0], [1], [0, 0, 1, 1], [], []>} : vector<2x32xf32>, vector<32x128xf32>, vector<2x128xf32> -> vector<2x128xf32>
    %156 = arith.addf %154, %155 : vector<2x128xf32>
    %157 = vector.extract_strided_slice %156 {offsets = [0, 0], sizes = [2, 32], strides = [1, 1]} : vector<2x128xf32> to vector<2x32xf32>
    %158 = arith.negf %157 : vector<2x32xf32>
    %159 = math.exp %158 : vector<2x32xf32>
    %cst_36 = arith.constant 1.000000e+00 : f32
    %160 = vector.broadcast %cst_36 : f32 to vector<2x32xf32>
    %161 = arith.addf %160, %159 : vector<2x32xf32>
    %162 = arith.divf %160, %161 : vector<2x32xf32>
    %163 = vector.extract_strided_slice %156 {offsets = [0, 32], sizes = [2, 32], strides = [1, 1]} : vector<2x128xf32> to vector<2x32xf32>
    %164 = arith.negf %163 : vector<2x32xf32>
    %165 = math.exp %164 : vector<2x32xf32>
    %cst_37 = arith.constant 1.000000e+00 : f32
    %166 = vector.broadcast %cst_37 : f32 to vector<2x32xf32>
    %167 = arith.addf %166, %165 : vector<2x32xf32>
    %168 = arith.divf %166, %167 : vector<2x32xf32>
    %169 = vector.extract_strided_slice %156 {offsets = [0, 64], sizes = [2, 32], strides = [1, 1]} : vector<2x128xf32> to vector<2x32xf32>
    %170 = math.tanh %169 : vector<2x32xf32>
    %171 = vector.extract_strided_slice %156 {offsets = [0, 96], sizes = [2, 32], strides = [1, 1]} : vector<2x128xf32> to vector<2x32xf32>
    %172 = arith.negf %171 : vector<2x32xf32>
    %173 = math.exp %172 : vector<2x32xf32>
    %cst_38 = arith.constant 1.000000e+00 : f32
    %174 = vector.broadcast %cst_38 : f32 to vector<2x32xf32>
    %175 = arith.addf %174, %173 : vector<2x32xf32>
    %176 = arith.divf %174, %175 : vector<2x32xf32>
    %177 = arith.mulf %168, %150 : vector<2x32xf32>
    %178 = arith.mulf %162, %170 : vector<2x32xf32>
    %179 = arith.addf %177, %178 : vector<2x32xf32>
    %180 = math.tanh %179 : vector<2x32xf32>
    %181 = arith.mulf %176, %180 : vector<2x32xf32>
    %c10 = arith.constant 10 : index
    %c0_39 = arith.constant 0 : index
    %182 = vector.load %arg13[%c10, %c0_39] : memref<16x32xf32, #tpu.memory_space<vmem>>, vector<2x32xf32>
    tpu.vector_store %arg13[%c10, %c0_39], %181 {strides = array<i32>} : memref<16x32xf32, #tpu.memory_space<vmem>>, vector<2x32xf32>,
    %183 = vector.extract_strided_slice %5 {offsets = [12, 0], sizes = [2, 128], strides = [1, 1]} : vector<16x128xf32> to vector<2x128xf32>
    %cst_40 = arith.constant dense<0.000000e+00> : vector<2x128xf32>
    %184 = tpu.matmul %181, %6, %cst_40 {dimension_numbers = #tpu.dot_dimension_numbers<[1], [0], [0], [1], [0, 0, 1, 1], [], []>} : vector<2x32xf32>, vector<32x128xf32>, vector<2x128xf32> -> vector<2x128xf32>
    %185 = arith.addf %183, %184 : vector<2x128xf32>
    %186 = vector.extract_strided_slice %185 {offsets = [0, 0], sizes = [2, 32], strides = [1, 1]} : vector<2x128xf32> to vector<2x32xf32>
    %187 = arith.negf %186 : vector<2x32xf32>
    %188 = math.exp %187 : vector<2x32xf32>
    %cst_41 = arith.constant 1.000000e+00 : f32
    %189 = vector.broadcast %cst_41 : f32 to vector<2x32xf32>
    %190 = arith.addf %189, %188 : vector<2x32xf32>
    %191 = arith.divf %189, %190 : vector<2x32xf32>
    %192 = vector.extract_strided_slice %185 {offsets = [0, 32], sizes = [2, 32], strides = [1, 1]} : vector<2x128xf32> to vector<2x32xf32>
    %193 = arith.negf %192 : vector<2x32xf32>
    %194 = math.exp %193 : vector<2x32xf32>
    %cst_42 = arith.constant 1.000000e+00 : f32
    %195 = vector.broadcast %cst_42 : f32 to vector<2x32xf32>
    %196 = arith.addf %195, %194 : vector<2x32xf32>
    %197 = arith.divf %195, %196 : vector<2x32xf32>
    %198 = vector.extract_strided_slice %185 {offsets = [0, 64], sizes = [2, 32], strides = [1, 1]} : vector<2x128xf32> to vector<2x32xf32>
    %199 = math.tanh %198 : vector<2x32xf32>
    %200 = vector.extract_strided_slice %185 {offsets = [0, 96], sizes = [2, 32], strides = [1, 1]} : vector<2x128xf32> to vector<2x32xf32>
    %201 = arith.negf %200 : vector<2x32xf32>
    %202 = math.exp %201 : vector<2x32xf32>
    %cst_43 = arith.constant 1.000000e+00 : f32
    %203 = vector.broadcast %cst_43 : f32 to vector<2x32xf32>
    %204 = arith.addf %203, %202 : vector<2x32xf32>
    %205 = arith.divf %203, %204 : vector<2x32xf32>
    %206 = arith.mulf %197, %179 : vector<2x32xf32>
    %207 = arith.mulf %191, %199 : vector<2x32xf32>
    %208 = arith.addf %206, %207 : vector<2x32xf32>
    %209 = math.tanh %208 : vector<2x32xf32>
    %210 = arith.mulf %205, %209 : vector<2x32xf32>
    %c12 = arith.constant 12 : index
    %c0_44 = arith.constant 0 : index
    %211 = vector.load %arg13[%c12, %c0_44] : memref<16x32xf32, #tpu.memory_space<vmem>>, vector<2x32xf32>
    tpu.vector_store %arg13[%c12, %c0_44], %210 {strides = array<i32>} : memref<16x32xf32, #tpu.memory_space<vmem>>, vector<2x32xf32>,
    %212 = vector.extract_strided_slice %5 {offsets = [14, 0], sizes = [2, 128], strides = [1, 1]} : vector<16x128xf32> to vector<2x128xf32>
    %cst_45 = arith.constant dense<0.000000e+00> : vector<2x128xf32>
    %213 = tpu.matmul %210, %6, %cst_45 {dimension_numbers = #tpu.dot_dimension_numbers<[1], [0], [0], [1], [0, 0, 1, 1], [], []>} : vector<2x32xf32>, vector<32x128xf32>, vector<2x128xf32> -> vector<2x128xf32>
    %214 = arith.addf %212, %213 : vector<2x128xf32>
    %215 = vector.extract_strided_slice %214 {offsets = [0, 0], sizes = [2, 32], strides = [1, 1]} : vector<2x128xf32> to vector<2x32xf32>
    %216 = arith.negf %215 : vector<2x32xf32>
    %217 = math.exp %216 : vector<2x32xf32>
    %cst_46 = arith.constant 1.000000e+00 : f32
    %218 = vector.broadcast %cst_46 : f32 to vector<2x32xf32>
    %219 = arith.addf %218, %217 : vector<2x32xf32>
    %220 = arith.divf %218, %219 : vector<2x32xf32>
    %221 = vector.extract_strided_slice %214 {offsets = [0, 32], sizes = [2, 32], strides = [1, 1]} : vector<2x128xf32> to vector<2x32xf32>
    %222 = arith.negf %221 : vector<2x32xf32>
    %223 = math.exp %222 : vector<2x32xf32>
    %cst_47 = arith.constant 1.000000e+00 : f32
    %224 = vector.broadcast %cst_47 : f32 to vector<2x32xf32>
    %225 = arith.addf %224, %223 : vector<2x32xf32>
    %226 = arith.divf %224, %225 : vector<2x32xf32>
    %227 = vector.extract_strided_slice %214 {offsets = [0, 64], sizes = [2, 32], strides = [1, 1]} : vector<2x128xf32> to vector<2x32xf32>
    %228 = math.tanh %227 : vector<2x32xf32>
    %229 = vector.extract_strided_slice %214 {offsets = [0, 96], sizes = [2, 32], strides = [1, 1]} : vector<2x128xf32> to vector<2x32xf32>
    %230 = arith.negf %229 : vector<2x32xf32>
    %231 = math.exp %230 : vector<2x32xf32>
    %cst_48 = arith.constant 1.000000e+00 : f32
    %232 = vector.broadcast %cst_48 : f32 to vector<2x32xf32>
    %233 = arith.addf %232, %231 : vector<2x32xf32>
    %234 = arith.divf %232, %233 : vector<2x32xf32>
    %235 = arith.mulf %226, %208 : vector<2x32xf32>
    %236 = arith.mulf %220, %228 : vector<2x32xf32>
    %237 = arith.addf %235, %236 : vector<2x32xf32>
    %238 = math.tanh %237 : vector<2x32xf32>
    %239 = arith.mulf %234, %238 : vector<2x32xf32>
    %c14 = arith.constant 14 : index
    %c0_49 = arith.constant 0 : index
    %240 = vector.load %arg13[%c14, %c0_49] : memref<16x32xf32, #tpu.memory_space<vmem>>, vector<2x32xf32>
    tpu.vector_store %arg13[%c14, %c0_49], %239 {strides = array<i32>} : memref<16x32xf32, #tpu.memory_space<vmem>>, vector<2x32xf32>,
    %c0_50 = arith.constant 0 : index
    %c0_51 = arith.constant 0 : index
    %241 = vector.load %arg13[%c0_50, %c0_51] : memref<16x32xf32, #tpu.memory_space<vmem>>, vector<16x32xf32>
    %c0_52 = arith.constant 0 : index
    %c0_53 = arith.constant 0 : index
    %242 = vector.load %arg4[%c0_52, %c0_53] : memref<32x128xf32, #tpu.memory_space<vmem>>, vector<32x128xf32>
    %cst_54 = arith.constant dense<0.000000e+00> : vector<16x128xf32>
    %243 = tpu.matmul %241, %242, %cst_54 {dimension_numbers = #tpu.dot_dimension_numbers<[1], [0], [0], [1], [0, 0, 1, 1], [], []>} : vector<16x32xf32>, vector<32x128xf32>, vector<16x128xf32> -> vector<16x128xf32>
    %c0_55 = arith.constant 0 : index
    %c0_56 = arith.constant 0 : index
    %244 = vector.load %arg6[%c0_55, %c0_56] : memref<1x128xf32, #tpu.memory_space<vmem>>, vector<1x128xf32>
    %245 = vector.broadcast %244 : vector<1x128xf32> to vector<16x128xf32>
    %246 = arith.addf %243, %245 : vector<16x128xf32>
    %c0_57 = arith.constant 0 : index
    %c0_58 = arith.constant 0 : index
    %247 = vector.load %arg5[%c0_57, %c0_58] : memref<32x128xf32, #tpu.memory_space<vmem>>, vector<32x128xf32>
    %cst_59 = arith.constant 0.000000e+00 : f32
    %248 = vector.broadcast %cst_59 : f32 to vector<2x32xf32>
    %cst_60 = arith.constant 0.000000e+00 : f32
    %249 = vector.broadcast %cst_60 : f32 to vector<2x32xf32>
    %250 = vector.extract_strided_slice %246 {offsets = [0, 0], sizes = [2, 128], strides = [1, 1]} : vector<16x128xf32> to vector<2x128xf32>
    %cst_61 = arith.constant dense<0.000000e+00> : vector<2x128xf32>
    %251 = tpu.matmul %248, %247, %cst_61 {dimension_numbers = #tpu.dot_dimension_numbers<[1], [0], [0], [1], [0, 0, 1, 1], [], []>} : vector<2x32xf32>, vector<32x128xf32>, vector<2x128xf32> -> vector<2x128xf32>
    %252 = arith.addf %250, %251 : vector<2x128xf32>
    %253 = vector.extract_strided_slice %252 {offsets = [0, 0], sizes = [2, 32], strides = [1, 1]} : vector<2x128xf32> to vector<2x32xf32>
    %254 = arith.negf %253 : vector<2x32xf32>
    %255 = math.exp %254 : vector<2x32xf32>
    %cst_62 = arith.constant 1.000000e+00 : f32
    %256 = vector.broadcast %cst_62 : f32 to vector<2x32xf32>
    %257 = arith.addf %256, %255 : vector<2x32xf32>
    %258 = arith.divf %256, %257 : vector<2x32xf32>
    %259 = vector.extract_strided_slice %252 {offsets = [0, 32], sizes = [2, 32], strides = [1, 1]} : vector<2x128xf32> to vector<2x32xf32>
    %260 = arith.negf %259 : vector<2x32xf32>
    %261 = math.exp %260 : vector<2x32xf32>
    %cst_63 = arith.constant 1.000000e+00 : f32
    %262 = vector.broadcast %cst_63 : f32 to vector<2x32xf32>
    %263 = arith.addf %262, %261 : vector<2x32xf32>
    %264 = arith.divf %262, %263 : vector<2x32xf32>
    %265 = vector.extract_strided_slice %252 {offsets = [0, 64], sizes = [2, 32], strides = [1, 1]} : vector<2x128xf32> to vector<2x32xf32>
    %266 = math.tanh %265 : vector<2x32xf32>
    %267 = vector.extract_strided_slice %252 {offsets = [0, 96], sizes = [2, 32], strides = [1, 1]} : vector<2x128xf32> to vector<2x32xf32>
    %268 = arith.negf %267 : vector<2x32xf32>
    %269 = math.exp %268 : vector<2x32xf32>
    %cst_64 = arith.constant 1.000000e+00 : f32
    %270 = vector.broadcast %cst_64 : f32 to vector<2x32xf32>
    %271 = arith.addf %270, %269 : vector<2x32xf32>
    %272 = arith.divf %270, %271 : vector<2x32xf32>
    %273 = arith.mulf %264, %249 : vector<2x32xf32>
    %274 = arith.mulf %258, %266 : vector<2x32xf32>
    %275 = arith.addf %273, %274 : vector<2x32xf32>
    %276 = math.tanh %275 : vector<2x32xf32>
    %277 = arith.mulf %272, %276 : vector<2x32xf32>
    %c0_65 = arith.constant 0 : index
    %c0_66 = arith.constant 0 : index
    %278 = vector.load %arg13[%c0_65, %c0_66] : memref<16x32xf32, #tpu.memory_space<vmem>>, vector<2x32xf32>
    tpu.vector_store %arg13[%c0_65, %c0_66], %277 {strides = array<i32>} : memref<16x32xf32, #tpu.memory_space<vmem>>, vector<2x32xf32>,
    %279 = vector.extract_strided_slice %246 {offsets = [2, 0], sizes = [2, 128], strides = [1, 1]} : vector<16x128xf32> to vector<2x128xf32>
    %cst_67 = arith.constant dense<0.000000e+00> : vector<2x128xf32>
    %280 = tpu.matmul %277, %247, %cst_67 {dimension_numbers = #tpu.dot_dimension_numbers<[1], [0], [0], [1], [0, 0, 1, 1], [], []>} : vector<2x32xf32>, vector<32x128xf32>, vector<2x128xf32> -> vector<2x128xf32>
    %281 = arith.addf %279, %280 : vector<2x128xf32>
    %282 = vector.extract_strided_slice %281 {offsets = [0, 0], sizes = [2, 32], strides = [1, 1]} : vector<2x128xf32> to vector<2x32xf32>
    %283 = arith.negf %282 : vector<2x32xf32>
    %284 = math.exp %283 : vector<2x32xf32>
    %cst_68 = arith.constant 1.000000e+00 : f32
    %285 = vector.broadcast %cst_68 : f32 to vector<2x32xf32>
    %286 = arith.addf %285, %284 : vector<2x32xf32>
    %287 = arith.divf %285, %286 : vector<2x32xf32>
    %288 = vector.extract_strided_slice %281 {offsets = [0, 32], sizes = [2, 32], strides = [1, 1]} : vector<2x128xf32> to vector<2x32xf32>
    %289 = arith.negf %288 : vector<2x32xf32>
    %290 = math.exp %289 : vector<2x32xf32>
    %cst_69 = arith.constant 1.000000e+00 : f32
    %291 = vector.broadcast %cst_69 : f32 to vector<2x32xf32>
    %292 = arith.addf %291, %290 : vector<2x32xf32>
    %293 = arith.divf %291, %292 : vector<2x32xf32>
    %294 = vector.extract_strided_slice %281 {offsets = [0, 64], sizes = [2, 32], strides = [1, 1]} : vector<2x128xf32> to vector<2x32xf32>
    %295 = math.tanh %294 : vector<2x32xf32>
    %296 = vector.extract_strided_slice %281 {offsets = [0, 96], sizes = [2, 32], strides = [1, 1]} : vector<2x128xf32> to vector<2x32xf32>
    %297 = arith.negf %296 : vector<2x32xf32>
    %298 = math.exp %297 : vector<2x32xf32>
    %cst_70 = arith.constant 1.000000e+00 : f32
    %299 = vector.broadcast %cst_70 : f32 to vector<2x32xf32>
    %300 = arith.addf %299, %298 : vector<2x32xf32>
    %301 = arith.divf %299, %300 : vector<2x32xf32>
    %302 = arith.mulf %293, %275 : vector<2x32xf32>
    %303 = arith.mulf %287, %295 : vector<2x32xf32>
    %304 = arith.addf %302, %303 : vector<2x32xf32>
    %305 = math.tanh %304 : vector<2x32xf32>
    %306 = arith.mulf %301, %305 : vector<2x32xf32>
    %c2_71 = arith.constant 2 : index
    %c0_72 = arith.constant 0 : index
    %307 = vector.load %arg13[%c2_71, %c0_72] : memref<16x32xf32, #tpu.memory_space<vmem>>, vector<2x32xf32>
    tpu.vector_store %arg13[%c2_71, %c0_72], %306 {strides = array<i32>} : memref<16x32xf32, #tpu.memory_space<vmem>>, vector<2x32xf32>,
    %308 = vector.extract_strided_slice %246 {offsets = [4, 0], sizes = [2, 128], strides = [1, 1]} : vector<16x128xf32> to vector<2x128xf32>
    %cst_73 = arith.constant dense<0.000000e+00> : vector<2x128xf32>
    %309 = tpu.matmul %306, %247, %cst_73 {dimension_numbers = #tpu.dot_dimension_numbers<[1], [0], [0], [1], [0, 0, 1, 1], [], []>} : vector<2x32xf32>, vector<32x128xf32>, vector<2x128xf32> -> vector<2x128xf32>
    %310 = arith.addf %308, %309 : vector<2x128xf32>
    %311 = vector.extract_strided_slice %310 {offsets = [0, 0], sizes = [2, 32], strides = [1, 1]} : vector<2x128xf32> to vector<2x32xf32>
    %312 = arith.negf %311 : vector<2x32xf32>
    %313 = math.exp %312 : vector<2x32xf32>
    %cst_74 = arith.constant 1.000000e+00 : f32
    %314 = vector.broadcast %cst_74 : f32 to vector<2x32xf32>
    %315 = arith.addf %314, %313 : vector<2x32xf32>
    %316 = arith.divf %314, %315 : vector<2x32xf32>
    %317 = vector.extract_strided_slice %310 {offsets = [0, 32], sizes = [2, 32], strides = [1, 1]} : vector<2x128xf32> to vector<2x32xf32>
    %318 = arith.negf %317 : vector<2x32xf32>
    %319 = math.exp %318 : vector<2x32xf32>
    %cst_75 = arith.constant 1.000000e+00 : f32
    %320 = vector.broadcast %cst_75 : f32 to vector<2x32xf32>
    %321 = arith.addf %320, %319 : vector<2x32xf32>
    %322 = arith.divf %320, %321 : vector<2x32xf32>
    %323 = vector.extract_strided_slice %310 {offsets = [0, 64], sizes = [2, 32], strides = [1, 1]} : vector<2x128xf32> to vector<2x32xf32>
    %324 = math.tanh %323 : vector<2x32xf32>
    %325 = vector.extract_strided_slice %310 {offsets = [0, 96], sizes = [2, 32], strides = [1, 1]} : vector<2x128xf32> to vector<2x32xf32>
    %326 = arith.negf %325 : vector<2x32xf32>
    %327 = math.exp %326 : vector<2x32xf32>
    %cst_76 = arith.constant 1.000000e+00 : f32
    %328 = vector.broadcast %cst_76 : f32 to vector<2x32xf32>
    %329 = arith.addf %328, %327 : vector<2x32xf32>
    %330 = arith.divf %328, %329 : vector<2x32xf32>
    %331 = arith.mulf %322, %304 : vector<2x32xf32>
    %332 = arith.mulf %316, %324 : vector<2x32xf32>
    %333 = arith.addf %331, %332 : vector<2x32xf32>
    %334 = math.tanh %333 : vector<2x32xf32>
    %335 = arith.mulf %330, %334 : vector<2x32xf32>
    %c4_77 = arith.constant 4 : index
    %c0_78 = arith.constant 0 : index
    %336 = vector.load %arg13[%c4_77, %c0_78] : memref<16x32xf32, #tpu.memory_space<vmem>>, vector<2x32xf32>
    tpu.vector_store %arg13[%c4_77, %c0_78], %335 {strides = array<i32>} : memref<16x32xf32, #tpu.memory_space<vmem>>, vector<2x32xf32>,
    %337 = vector.extract_strided_slice %246 {offsets = [6, 0], sizes = [2, 128], strides = [1, 1]} : vector<16x128xf32> to vector<2x128xf32>
    %cst_79 = arith.constant dense<0.000000e+00> : vector<2x128xf32>
    %338 = tpu.matmul %335, %247, %cst_79 {dimension_numbers = #tpu.dot_dimension_numbers<[1], [0], [0], [1], [0, 0, 1, 1], [], []>} : vector<2x32xf32>, vector<32x128xf32>, vector<2x128xf32> -> vector<2x128xf32>
    %339 = arith.addf %337, %338 : vector<2x128xf32>
    %340 = vector.extract_strided_slice %339 {offsets = [0, 0], sizes = [2, 32], strides = [1, 1]} : vector<2x128xf32> to vector<2x32xf32>
    %341 = arith.negf %340 : vector<2x32xf32>
    %342 = math.exp %341 : vector<2x32xf32>
    %cst_80 = arith.constant 1.000000e+00 : f32
    %343 = vector.broadcast %cst_80 : f32 to vector<2x32xf32>
    %344 = arith.addf %343, %342 : vector<2x32xf32>
    %345 = arith.divf %343, %344 : vector<2x32xf32>
    %346 = vector.extract_strided_slice %339 {offsets = [0, 32], sizes = [2, 32], strides = [1, 1]} : vector<2x128xf32> to vector<2x32xf32>
    %347 = arith.negf %346 : vector<2x32xf32>
    %348 = math.exp %347 : vector<2x32xf32>
    %cst_81 = arith.constant 1.000000e+00 : f32
    %349 = vector.broadcast %cst_81 : f32 to vector<2x32xf32>
    %350 = arith.addf %349, %348 : vector<2x32xf32>
    %351 = arith.divf %349, %350 : vector<2x32xf32>
    %352 = vector.extract_strided_slice %339 {offsets = [0, 64], sizes = [2, 32], strides = [1, 1]} : vector<2x128xf32> to vector<2x32xf32>
    %353 = math.tanh %352 : vector<2x32xf32>
    %354 = vector.extract_strided_slice %339 {offsets = [0, 96], sizes = [2, 32], strides = [1, 1]} : vector<2x128xf32> to vector<2x32xf32>
    %355 = arith.negf %354 : vector<2x32xf32>
    %356 = math.exp %355 : vector<2x32xf32>
    %cst_82 = arith.constant 1.000000e+00 : f32
    %357 = vector.broadcast %cst_82 : f32 to vector<2x32xf32>
    %358 = arith.addf %357, %356 : vector<2x32xf32>
    %359 = arith.divf %357, %358 : vector<2x32xf32>
    %360 = arith.mulf %351, %333 : vector<2x32xf32>
    %361 = arith.mulf %345, %353 : vector<2x32xf32>
    %362 = arith.addf %360, %361 : vector<2x32xf32>
    %363 = math.tanh %362 : vector<2x32xf32>
    %364 = arith.mulf %359, %363 : vector<2x32xf32>
    %c6_83 = arith.constant 6 : index
    %c0_84 = arith.constant 0 : index
    %365 = vector.load %arg13[%c6_83, %c0_84] : memref<16x32xf32, #tpu.memory_space<vmem>>, vector<2x32xf32>
    tpu.vector_store %arg13[%c6_83, %c0_84], %364 {strides = array<i32>} : memref<16x32xf32, #tpu.memory_space<vmem>>, vector<2x32xf32>,
    %366 = vector.extract_strided_slice %246 {offsets = [8, 0], sizes = [2, 128], strides = [1, 1]} : vector<16x128xf32> to vector<2x128xf32>
    %cst_85 = arith.constant dense<0.000000e+00> : vector<2x128xf32>
    %367 = tpu.matmul %364, %247, %cst_85 {dimension_numbers = #tpu.dot_dimension_numbers<[1], [0], [0], [1], [0, 0, 1, 1], [], []>} : vector<2x32xf32>, vector<32x128xf32>, vector<2x128xf32> -> vector<2x128xf32>
    %368 = arith.addf %366, %367 : vector<2x128xf32>
    %369 = vector.extract_strided_slice %368 {offsets = [0, 0], sizes = [2, 32], strides = [1, 1]} : vector<2x128xf32> to vector<2x32xf32>
    %370 = arith.negf %369 : vector<2x32xf32>
    %371 = math.exp %370 : vector<2x32xf32>
    %cst_86 = arith.constant 1.000000e+00 : f32
    %372 = vector.broadcast %cst_86 : f32 to vector<2x32xf32>
    %373 = arith.addf %372, %371 : vector<2x32xf32>
    %374 = arith.divf %372, %373 : vector<2x32xf32>
    %375 = vector.extract_strided_slice %368 {offsets = [0, 32], sizes = [2, 32], strides = [1, 1]} : vector<2x128xf32> to vector<2x32xf32>
    %376 = arith.negf %375 : vector<2x32xf32>
    %377 = math.exp %376 : vector<2x32xf32>
    %cst_87 = arith.constant 1.000000e+00 : f32
    %378 = vector.broadcast %cst_87 : f32 to vector<2x32xf32>
    %379 = arith.addf %378, %377 : vector<2x32xf32>
    %380 = arith.divf %378, %379 : vector<2x32xf32>
    %381 = vector.extract_strided_slice %368 {offsets = [0, 64], sizes = [2, 32], strides = [1, 1]} : vector<2x128xf32> to vector<2x32xf32>
    %382 = math.tanh %381 : vector<2x32xf32>
    %383 = vector.extract_strided_slice %368 {offsets = [0, 96], sizes = [2, 32], strides = [1, 1]} : vector<2x128xf32> to vector<2x32xf32>
    %384 = arith.negf %383 : vector<2x32xf32>
    %385 = math.exp %384 : vector<2x32xf32>
    %cst_88 = arith.constant 1.000000e+00 : f32
    %386 = vector.broadcast %cst_88 : f32 to vector<2x32xf32>
    %387 = arith.addf %386, %385 : vector<2x32xf32>
    %388 = arith.divf %386, %387 : vector<2x32xf32>
    %389 = arith.mulf %380, %362 : vector<2x32xf32>
    %390 = arith.mulf %374, %382 : vector<2x32xf32>
    %391 = arith.addf %389, %390 : vector<2x32xf32>
    %392 = math.tanh %391 : vector<2x32xf32>
    %393 = arith.mulf %388, %392 : vector<2x32xf32>
    %c8_89 = arith.constant 8 : index
    %c0_90 = arith.constant 0 : index
    %394 = vector.load %arg13[%c8_89, %c0_90] : memref<16x32xf32, #tpu.memory_space<vmem>>, vector<2x32xf32>
    tpu.vector_store %arg13[%c8_89, %c0_90], %393 {strides = array<i32>} : memref<16x32xf32, #tpu.memory_space<vmem>>, vector<2x32xf32>,
    %395 = vector.extract_strided_slice %246 {offsets = [10, 0], sizes = [2, 128], strides = [1, 1]} : vector<16x128xf32> to vector<2x128xf32>
    %cst_91 = arith.constant dense<0.000000e+00> : vector<2x128xf32>
    %396 = tpu.matmul %393, %247, %cst_91 {dimension_numbers = #tpu.dot_dimension_numbers<[1], [0], [0], [1], [0, 0, 1, 1], [], []>} : vector<2x32xf32>, vector<32x128xf32>, vector<2x128xf32> -> vector<2x128xf32>
    %397 = arith.addf %395, %396 : vector<2x128xf32>
    %398 = vector.extract_strided_slice %397 {offsets = [0, 0], sizes = [2, 32], strides = [1, 1]} : vector<2x128xf32> to vector<2x32xf32>
    %399 = arith.negf %398 : vector<2x32xf32>
    %400 = math.exp %399 : vector<2x32xf32>
    %cst_92 = arith.constant 1.000000e+00 : f32
    %401 = vector.broadcast %cst_92 : f32 to vector<2x32xf32>
    %402 = arith.addf %401, %400 : vector<2x32xf32>
    %403 = arith.divf %401, %402 : vector<2x32xf32>
    %404 = vector.extract_strided_slice %397 {offsets = [0, 32], sizes = [2, 32], strides = [1, 1]} : vector<2x128xf32> to vector<2x32xf32>
    %405 = arith.negf %404 : vector<2x32xf32>
    %406 = math.exp %405 : vector<2x32xf32>
    %cst_93 = arith.constant 1.000000e+00 : f32
    %407 = vector.broadcast %cst_93 : f32 to vector<2x32xf32>
    %408 = arith.addf %407, %406 : vector<2x32xf32>
    %409 = arith.divf %407, %408 : vector<2x32xf32>
    %410 = vector.extract_strided_slice %397 {offsets = [0, 64], sizes = [2, 32], strides = [1, 1]} : vector<2x128xf32> to vector<2x32xf32>
    %411 = math.tanh %410 : vector<2x32xf32>
    %412 = vector.extract_strided_slice %397 {offsets = [0, 96], sizes = [2, 32], strides = [1, 1]} : vector<2x128xf32> to vector<2x32xf32>
    %413 = arith.negf %412 : vector<2x32xf32>
    %414 = math.exp %413 : vector<2x32xf32>
    %cst_94 = arith.constant 1.000000e+00 : f32
    %415 = vector.broadcast %cst_94 : f32 to vector<2x32xf32>
    %416 = arith.addf %415, %414 : vector<2x32xf32>
    %417 = arith.divf %415, %416 : vector<2x32xf32>
    %418 = arith.mulf %409, %391 : vector<2x32xf32>
    %419 = arith.mulf %403, %411 : vector<2x32xf32>
    %420 = arith.addf %418, %419 : vector<2x32xf32>
    %421 = math.tanh %420 : vector<2x32xf32>
    %422 = arith.mulf %417, %421 : vector<2x32xf32>
    %c10_95 = arith.constant 10 : index
    %c0_96 = arith.constant 0 : index
    %423 = vector.load %arg13[%c10_95, %c0_96] : memref<16x32xf32, #tpu.memory_space<vmem>>, vector<2x32xf32>
    tpu.vector_store %arg13[%c10_95, %c0_96], %422 {strides = array<i32>} : memref<16x32xf32, #tpu.memory_space<vmem>>, vector<2x32xf32>,
    %424 = vector.extract_strided_slice %246 {offsets = [12, 0], sizes = [2, 128], strides = [1, 1]} : vector<16x128xf32> to vector<2x128xf32>
    %cst_97 = arith.constant dense<0.000000e+00> : vector<2x128xf32>
    %425 = tpu.matmul %422, %247, %cst_97 {dimension_numbers = #tpu.dot_dimension_numbers<[1], [0], [0], [1], [0, 0, 1, 1], [], []>} : vector<2x32xf32>, vector<32x128xf32>, vector<2x128xf32> -> vector<2x128xf32>
    %426 = arith.addf %424, %425 : vector<2x128xf32>
    %427 = vector.extract_strided_slice %426 {offsets = [0, 0], sizes = [2, 32], strides = [1, 1]} : vector<2x128xf32> to vector<2x32xf32>
    %428 = arith.negf %427 : vector<2x32xf32>
    %429 = math.exp %428 : vector<2x32xf32>
    %cst_98 = arith.constant 1.000000e+00 : f32
    %430 = vector.broadcast %cst_98 : f32 to vector<2x32xf32>
    %431 = arith.addf %430, %429 : vector<2x32xf32>
    %432 = arith.divf %430, %431 : vector<2x32xf32>
    %433 = vector.extract_strided_slice %426 {offsets = [0, 32], sizes = [2, 32], strides = [1, 1]} : vector<2x128xf32> to vector<2x32xf32>
    %434 = arith.negf %433 : vector<2x32xf32>
    %435 = math.exp %434 : vector<2x32xf32>
    %cst_99 = arith.constant 1.000000e+00 : f32
    %436 = vector.broadcast %cst_99 : f32 to vector<2x32xf32>
    %437 = arith.addf %436, %435 : vector<2x32xf32>
    %438 = arith.divf %436, %437 : vector<2x32xf32>
    %439 = vector.extract_strided_slice %426 {offsets = [0, 64], sizes = [2, 32], strides = [1, 1]} : vector<2x128xf32> to vector<2x32xf32>
    %440 = math.tanh %439 : vector<2x32xf32>
    %441 = vector.extract_strided_slice %426 {offsets = [0, 96], sizes = [2, 32], strides = [1, 1]} : vector<2x128xf32> to vector<2x32xf32>
    %442 = arith.negf %441 : vector<2x32xf32>
    %443 = math.exp %442 : vector<2x32xf32>
    %cst_100 = arith.constant 1.000000e+00 : f32
    %444 = vector.broadcast %cst_100 : f32 to vector<2x32xf32>
    %445 = arith.addf %444, %443 : vector<2x32xf32>
    %446 = arith.divf %444, %445 : vector<2x32xf32>
    %447 = arith.mulf %438, %420 : vector<2x32xf32>
    %448 = arith.mulf %432, %440 : vector<2x32xf32>
    %449 = arith.addf %447, %448 : vector<2x32xf32>
    %450 = math.tanh %449 : vector<2x32xf32>
    %451 = arith.mulf %446, %450 : vector<2x32xf32>
    %c12_101 = arith.constant 12 : index
    %c0_102 = arith.constant 0 : index
    %452 = vector.load %arg13[%c12_101, %c0_102] : memref<16x32xf32, #tpu.memory_space<vmem>>, vector<2x32xf32>
    tpu.vector_store %arg13[%c12_101, %c0_102], %451 {strides = array<i32>} : memref<16x32xf32, #tpu.memory_space<vmem>>, vector<2x32xf32>,
    %453 = vector.extract_strided_slice %246 {offsets = [14, 0], sizes = [2, 128], strides = [1, 1]} : vector<16x128xf32> to vector<2x128xf32>
    %cst_103 = arith.constant dense<0.000000e+00> : vector<2x128xf32>
    %454 = tpu.matmul %451, %247, %cst_103 {dimension_numbers = #tpu.dot_dimension_numbers<[1], [0], [0], [1], [0, 0, 1, 1], [], []>} : vector<2x32xf32>, vector<32x128xf32>, vector<2x128xf32> -> vector<2x128xf32>
    %455 = arith.addf %453, %454 : vector<2x128xf32>
    %456 = vector.extract_strided_slice %455 {offsets = [0, 0], sizes = [2, 32], strides = [1, 1]} : vector<2x128xf32> to vector<2x32xf32>
    %457 = arith.negf %456 : vector<2x32xf32>
    %458 = math.exp %457 : vector<2x32xf32>
    %cst_104 = arith.constant 1.000000e+00 : f32
    %459 = vector.broadcast %cst_104 : f32 to vector<2x32xf32>
    %460 = arith.addf %459, %458 : vector<2x32xf32>
    %461 = arith.divf %459, %460 : vector<2x32xf32>
    %462 = vector.extract_strided_slice %455 {offsets = [0, 32], sizes = [2, 32], strides = [1, 1]} : vector<2x128xf32> to vector<2x32xf32>
    %463 = arith.negf %462 : vector<2x32xf32>
    %464 = math.exp %463 : vector<2x32xf32>
    %cst_105 = arith.constant 1.000000e+00 : f32
    %465 = vector.broadcast %cst_105 : f32 to vector<2x32xf32>
    %466 = arith.addf %465, %464 : vector<2x32xf32>
    %467 = arith.divf %465, %466 : vector<2x32xf32>
    %468 = vector.extract_strided_slice %455 {offsets = [0, 64], sizes = [2, 32], strides = [1, 1]} : vector<2x128xf32> to vector<2x32xf32>
    %469 = math.tanh %468 : vector<2x32xf32>
    %470 = vector.extract_strided_slice %455 {offsets = [0, 96], sizes = [2, 32], strides = [1, 1]} : vector<2x128xf32> to vector<2x32xf32>
    %471 = arith.negf %470 : vector<2x32xf32>
    %472 = math.exp %471 : vector<2x32xf32>
    %cst_106 = arith.constant 1.000000e+00 : f32
    %473 = vector.broadcast %cst_106 : f32 to vector<2x32xf32>
    %474 = arith.addf %473, %472 : vector<2x32xf32>
    %475 = arith.divf %473, %474 : vector<2x32xf32>
    %476 = arith.mulf %467, %449 : vector<2x32xf32>
    %477 = arith.mulf %461, %469 : vector<2x32xf32>
    %478 = arith.addf %476, %477 : vector<2x32xf32>
    %479 = math.tanh %478 : vector<2x32xf32>
    %480 = arith.mulf %475, %479 : vector<2x32xf32>
    %c14_107 = arith.constant 14 : index
    %c0_108 = arith.constant 0 : index
    %481 = vector.load %arg13[%c14_107, %c0_108] : memref<16x32xf32, #tpu.memory_space<vmem>>, vector<2x32xf32>
    tpu.vector_store %arg13[%c14_107, %c0_108], %480 {strides = array<i32>} : memref<16x32xf32, #tpu.memory_space<vmem>>, vector<2x32xf32>,
    %c0_109 = arith.constant 0 : index
    %c0_110 = arith.constant 0 : index
    %482 = vector.load %arg13[%c0_109, %c0_110] : memref<16x32xf32, #tpu.memory_space<vmem>>, vector<16x32xf32>
    %c0_111 = arith.constant 0 : index
    %c0_112 = arith.constant 0 : index
    %483 = vector.load %arg7[%c0_111, %c0_112] : memref<32x128xf32, #tpu.memory_space<vmem>>, vector<32x128xf32>
    %cst_113 = arith.constant dense<0.000000e+00> : vector<16x128xf32>
    %484 = tpu.matmul %482, %483, %cst_113 {dimension_numbers = #tpu.dot_dimension_numbers<[1], [0], [0], [1], [0, 0, 1, 1], [], []>} : vector<16x32xf32>, vector<32x128xf32>, vector<16x128xf32> -> vector<16x128xf32>
    %c0_114 = arith.constant 0 : index
    %c0_115 = arith.constant 0 : index
    %485 = vector.load %arg9[%c0_114, %c0_115] : memref<1x128xf32, #tpu.memory_space<vmem>>, vector<1x128xf32>
    %486 = vector.broadcast %485 : vector<1x128xf32> to vector<16x128xf32>
    %487 = arith.addf %484, %486 : vector<16x128xf32>
    %c0_116 = arith.constant 0 : index
    %c0_117 = arith.constant 0 : index
    %488 = vector.load %arg8[%c0_116, %c0_117] : memref<32x128xf32, #tpu.memory_space<vmem>>, vector<32x128xf32>
    %cst_118 = arith.constant 0.000000e+00 : f32
    %489 = vector.broadcast %cst_118 : f32 to vector<2x32xf32>
    %cst_119 = arith.constant 0.000000e+00 : f32
    %490 = vector.broadcast %cst_119 : f32 to vector<2x32xf32>
    %491 = vector.extract_strided_slice %487 {offsets = [0, 0], sizes = [2, 128], strides = [1, 1]} : vector<16x128xf32> to vector<2x128xf32>
    %cst_120 = arith.constant dense<0.000000e+00> : vector<2x128xf32>
    %492 = tpu.matmul %489, %488, %cst_120 {dimension_numbers = #tpu.dot_dimension_numbers<[1], [0], [0], [1], [0, 0, 1, 1], [], []>} : vector<2x32xf32>, vector<32x128xf32>, vector<2x128xf32> -> vector<2x128xf32>
    %493 = arith.addf %491, %492 : vector<2x128xf32>
    %494 = vector.extract_strided_slice %493 {offsets = [0, 0], sizes = [2, 32], strides = [1, 1]} : vector<2x128xf32> to vector<2x32xf32>
    %495 = arith.negf %494 : vector<2x32xf32>
    %496 = math.exp %495 : vector<2x32xf32>
    %cst_121 = arith.constant 1.000000e+00 : f32
    %497 = vector.broadcast %cst_121 : f32 to vector<2x32xf32>
    %498 = arith.addf %497, %496 : vector<2x32xf32>
    %499 = arith.divf %497, %498 : vector<2x32xf32>
    %500 = vector.extract_strided_slice %493 {offsets = [0, 32], sizes = [2, 32], strides = [1, 1]} : vector<2x128xf32> to vector<2x32xf32>
    %501 = arith.negf %500 : vector<2x32xf32>
    %502 = math.exp %501 : vector<2x32xf32>
    %cst_122 = arith.constant 1.000000e+00 : f32
    %503 = vector.broadcast %cst_122 : f32 to vector<2x32xf32>
    %504 = arith.addf %503, %502 : vector<2x32xf32>
    %505 = arith.divf %503, %504 : vector<2x32xf32>
    %506 = vector.extract_strided_slice %493 {offsets = [0, 64], sizes = [2, 32], strides = [1, 1]} : vector<2x128xf32> to vector<2x32xf32>
    %507 = math.tanh %506 : vector<2x32xf32>
    %508 = vector.extract_strided_slice %493 {offsets = [0, 96], sizes = [2, 32], strides = [1, 1]} : vector<2x128xf32> to vector<2x32xf32>
    %509 = arith.negf %508 : vector<2x32xf32>
    %510 = math.exp %509 : vector<2x32xf32>
    %cst_123 = arith.constant 1.000000e+00 : f32
    %511 = vector.broadcast %cst_123 : f32 to vector<2x32xf32>
    %512 = arith.addf %511, %510 : vector<2x32xf32>
    %513 = arith.divf %511, %512 : vector<2x32xf32>
    %514 = arith.mulf %505, %490 : vector<2x32xf32>
    %515 = arith.mulf %499, %507 : vector<2x32xf32>
    %516 = arith.addf %514, %515 : vector<2x32xf32>
    %517 = math.tanh %516 : vector<2x32xf32>
    %518 = arith.mulf %513, %517 : vector<2x32xf32>
    %c0_124 = arith.constant 0 : index
    %c0_125 = arith.constant 0 : index
    %519 = vector.load %arg13[%c0_124, %c0_125] : memref<16x32xf32, #tpu.memory_space<vmem>>, vector<2x32xf32>
    tpu.vector_store %arg13[%c0_124, %c0_125], %518 {strides = array<i32>} : memref<16x32xf32, #tpu.memory_space<vmem>>, vector<2x32xf32>,
    %520 = vector.extract_strided_slice %487 {offsets = [2, 0], sizes = [2, 128], strides = [1, 1]} : vector<16x128xf32> to vector<2x128xf32>
    %cst_126 = arith.constant dense<0.000000e+00> : vector<2x128xf32>
    %521 = tpu.matmul %518, %488, %cst_126 {dimension_numbers = #tpu.dot_dimension_numbers<[1], [0], [0], [1], [0, 0, 1, 1], [], []>} : vector<2x32xf32>, vector<32x128xf32>, vector<2x128xf32> -> vector<2x128xf32>
    %522 = arith.addf %520, %521 : vector<2x128xf32>
    %523 = vector.extract_strided_slice %522 {offsets = [0, 0], sizes = [2, 32], strides = [1, 1]} : vector<2x128xf32> to vector<2x32xf32>
    %524 = arith.negf %523 : vector<2x32xf32>
    %525 = math.exp %524 : vector<2x32xf32>
    %cst_127 = arith.constant 1.000000e+00 : f32
    %526 = vector.broadcast %cst_127 : f32 to vector<2x32xf32>
    %527 = arith.addf %526, %525 : vector<2x32xf32>
    %528 = arith.divf %526, %527 : vector<2x32xf32>
    %529 = vector.extract_strided_slice %522 {offsets = [0, 32], sizes = [2, 32], strides = [1, 1]} : vector<2x128xf32> to vector<2x32xf32>
    %530 = arith.negf %529 : vector<2x32xf32>
    %531 = math.exp %530 : vector<2x32xf32>
    %cst_128 = arith.constant 1.000000e+00 : f32
    %532 = vector.broadcast %cst_128 : f32 to vector<2x32xf32>
    %533 = arith.addf %532, %531 : vector<2x32xf32>
    %534 = arith.divf %532, %533 : vector<2x32xf32>
    %535 = vector.extract_strided_slice %522 {offsets = [0, 64], sizes = [2, 32], strides = [1, 1]} : vector<2x128xf32> to vector<2x32xf32>
    %536 = math.tanh %535 : vector<2x32xf32>
    %537 = vector.extract_strided_slice %522 {offsets = [0, 96], sizes = [2, 32], strides = [1, 1]} : vector<2x128xf32> to vector<2x32xf32>
    %538 = arith.negf %537 : vector<2x32xf32>
    %539 = math.exp %538 : vector<2x32xf32>
    %cst_129 = arith.constant 1.000000e+00 : f32
    %540 = vector.broadcast %cst_129 : f32 to vector<2x32xf32>
    %541 = arith.addf %540, %539 : vector<2x32xf32>
    %542 = arith.divf %540, %541 : vector<2x32xf32>
    %543 = arith.mulf %534, %516 : vector<2x32xf32>
    %544 = arith.mulf %528, %536 : vector<2x32xf32>
    %545 = arith.addf %543, %544 : vector<2x32xf32>
    %546 = math.tanh %545 : vector<2x32xf32>
    %547 = arith.mulf %542, %546 : vector<2x32xf32>
    %c2_130 = arith.constant 2 : index
    %c0_131 = arith.constant 0 : index
    %548 = vector.load %arg13[%c2_130, %c0_131] : memref<16x32xf32, #tpu.memory_space<vmem>>, vector<2x32xf32>
    tpu.vector_store %arg13[%c2_130, %c0_131], %547 {strides = array<i32>} : memref<16x32xf32, #tpu.memory_space<vmem>>, vector<2x32xf32>,
    %549 = vector.extract_strided_slice %487 {offsets = [4, 0], sizes = [2, 128], strides = [1, 1]} : vector<16x128xf32> to vector<2x128xf32>
    %cst_132 = arith.constant dense<0.000000e+00> : vector<2x128xf32>
    %550 = tpu.matmul %547, %488, %cst_132 {dimension_numbers = #tpu.dot_dimension_numbers<[1], [0], [0], [1], [0, 0, 1, 1], [], []>} : vector<2x32xf32>, vector<32x128xf32>, vector<2x128xf32> -> vector<2x128xf32>
    %551 = arith.addf %549, %550 : vector<2x128xf32>
    %552 = vector.extract_strided_slice %551 {offsets = [0, 0], sizes = [2, 32], strides = [1, 1]} : vector<2x128xf32> to vector<2x32xf32>
    %553 = arith.negf %552 : vector<2x32xf32>
    %554 = math.exp %553 : vector<2x32xf32>
    %cst_133 = arith.constant 1.000000e+00 : f32
    %555 = vector.broadcast %cst_133 : f32 to vector<2x32xf32>
    %556 = arith.addf %555, %554 : vector<2x32xf32>
    %557 = arith.divf %555, %556 : vector<2x32xf32>
    %558 = vector.extract_strided_slice %551 {offsets = [0, 32], sizes = [2, 32], strides = [1, 1]} : vector<2x128xf32> to vector<2x32xf32>
    %559 = arith.negf %558 : vector<2x32xf32>
    %560 = math.exp %559 : vector<2x32xf32>
    %cst_134 = arith.constant 1.000000e+00 : f32
    %561 = vector.broadcast %cst_134 : f32 to vector<2x32xf32>
    %562 = arith.addf %561, %560 : vector<2x32xf32>
    %563 = arith.divf %561, %562 : vector<2x32xf32>
    %564 = vector.extract_strided_slice %551 {offsets = [0, 64], sizes = [2, 32], strides = [1, 1]} : vector<2x128xf32> to vector<2x32xf32>
    %565 = math.tanh %564 : vector<2x32xf32>
    %566 = vector.extract_strided_slice %551 {offsets = [0, 96], sizes = [2, 32], strides = [1, 1]} : vector<2x128xf32> to vector<2x32xf32>
    %567 = arith.negf %566 : vector<2x32xf32>
    %568 = math.exp %567 : vector<2x32xf32>
    %cst_135 = arith.constant 1.000000e+00 : f32
    %569 = vector.broadcast %cst_135 : f32 to vector<2x32xf32>
    %570 = arith.addf %569, %568 : vector<2x32xf32>
    %571 = arith.divf %569, %570 : vector<2x32xf32>
    %572 = arith.mulf %563, %545 : vector<2x32xf32>
    %573 = arith.mulf %557, %565 : vector<2x32xf32>
    %574 = arith.addf %572, %573 : vector<2x32xf32>
    %575 = math.tanh %574 : vector<2x32xf32>
    %576 = arith.mulf %571, %575 : vector<2x32xf32>
    %c4_136 = arith.constant 4 : index
    %c0_137 = arith.constant 0 : index
    %577 = vector.load %arg13[%c4_136, %c0_137] : memref<16x32xf32, #tpu.memory_space<vmem>>, vector<2x32xf32>
    tpu.vector_store %arg13[%c4_136, %c0_137], %576 {strides = array<i32>} : memref<16x32xf32, #tpu.memory_space<vmem>>, vector<2x32xf32>,
    %578 = vector.extract_strided_slice %487 {offsets = [6, 0], sizes = [2, 128], strides = [1, 1]} : vector<16x128xf32> to vector<2x128xf32>
    %cst_138 = arith.constant dense<0.000000e+00> : vector<2x128xf32>
    %579 = tpu.matmul %576, %488, %cst_138 {dimension_numbers = #tpu.dot_dimension_numbers<[1], [0], [0], [1], [0, 0, 1, 1], [], []>} : vector<2x32xf32>, vector<32x128xf32>, vector<2x128xf32> -> vector<2x128xf32>
    %580 = arith.addf %578, %579 : vector<2x128xf32>
    %581 = vector.extract_strided_slice %580 {offsets = [0, 0], sizes = [2, 32], strides = [1, 1]} : vector<2x128xf32> to vector<2x32xf32>
    %582 = arith.negf %581 : vector<2x32xf32>
    %583 = math.exp %582 : vector<2x32xf32>
    %cst_139 = arith.constant 1.000000e+00 : f32
    %584 = vector.broadcast %cst_139 : f32 to vector<2x32xf32>
    %585 = arith.addf %584, %583 : vector<2x32xf32>
    %586 = arith.divf %584, %585 : vector<2x32xf32>
    %587 = vector.extract_strided_slice %580 {offsets = [0, 32], sizes = [2, 32], strides = [1, 1]} : vector<2x128xf32> to vector<2x32xf32>
    %588 = arith.negf %587 : vector<2x32xf32>
    %589 = math.exp %588 : vector<2x32xf32>
    %cst_140 = arith.constant 1.000000e+00 : f32
    %590 = vector.broadcast %cst_140 : f32 to vector<2x32xf32>
    %591 = arith.addf %590, %589 : vector<2x32xf32>
    %592 = arith.divf %590, %591 : vector<2x32xf32>
    %593 = vector.extract_strided_slice %580 {offsets = [0, 64], sizes = [2, 32], strides = [1, 1]} : vector<2x128xf32> to vector<2x32xf32>
    %594 = math.tanh %593 : vector<2x32xf32>
    %595 = vector.extract_strided_slice %580 {offsets = [0, 96], sizes = [2, 32], strides = [1, 1]} : vector<2x128xf32> to vector<2x32xf32>
    %596 = arith.negf %595 : vector<2x32xf32>
    %597 = math.exp %596 : vector<2x32xf32>
    %cst_141 = arith.constant 1.000000e+00 : f32
    %598 = vector.broadcast %cst_141 : f32 to vector<2x32xf32>
    %599 = arith.addf %598, %597 : vector<2x32xf32>
    %600 = arith.divf %598, %599 : vector<2x32xf32>
    %601 = arith.mulf %592, %574 : vector<2x32xf32>
    %602 = arith.mulf %586, %594 : vector<2x32xf32>
    %603 = arith.addf %601, %602 : vector<2x32xf32>
    %604 = math.tanh %603 : vector<2x32xf32>
    %605 = arith.mulf %600, %604 : vector<2x32xf32>
    %c6_142 = arith.constant 6 : index
    %c0_143 = arith.constant 0 : index
    %606 = vector.load %arg13[%c6_142, %c0_143] : memref<16x32xf32, #tpu.memory_space<vmem>>, vector<2x32xf32>
    tpu.vector_store %arg13[%c6_142, %c0_143], %605 {strides = array<i32>} : memref<16x32xf32, #tpu.memory_space<vmem>>, vector<2x32xf32>,
    %607 = vector.extract_strided_slice %487 {offsets = [8, 0], sizes = [2, 128], strides = [1, 1]} : vector<16x128xf32> to vector<2x128xf32>
    %cst_144 = arith.constant dense<0.000000e+00> : vector<2x128xf32>
    %608 = tpu.matmul %605, %488, %cst_144 {dimension_numbers = #tpu.dot_dimension_numbers<[1], [0], [0], [1], [0, 0, 1, 1], [], []>} : vector<2x32xf32>, vector<32x128xf32>, vector<2x128xf32> -> vector<2x128xf32>
    %609 = arith.addf %607, %608 : vector<2x128xf32>
    %610 = vector.extract_strided_slice %609 {offsets = [0, 0], sizes = [2, 32], strides = [1, 1]} : vector<2x128xf32> to vector<2x32xf32>
    %611 = arith.negf %610 : vector<2x32xf32>
    %612 = math.exp %611 : vector<2x32xf32>
    %cst_145 = arith.constant 1.000000e+00 : f32
    %613 = vector.broadcast %cst_145 : f32 to vector<2x32xf32>
    %614 = arith.addf %613, %612 : vector<2x32xf32>
    %615 = arith.divf %613, %614 : vector<2x32xf32>
    %616 = vector.extract_strided_slice %609 {offsets = [0, 32], sizes = [2, 32], strides = [1, 1]} : vector<2x128xf32> to vector<2x32xf32>
    %617 = arith.negf %616 : vector<2x32xf32>
    %618 = math.exp %617 : vector<2x32xf32>
    %cst_146 = arith.constant 1.000000e+00 : f32
    %619 = vector.broadcast %cst_146 : f32 to vector<2x32xf32>
    %620 = arith.addf %619, %618 : vector<2x32xf32>
    %621 = arith.divf %619, %620 : vector<2x32xf32>
    %622 = vector.extract_strided_slice %609 {offsets = [0, 64], sizes = [2, 32], strides = [1, 1]} : vector<2x128xf32> to vector<2x32xf32>
    %623 = math.tanh %622 : vector<2x32xf32>
    %624 = vector.extract_strided_slice %609 {offsets = [0, 96], sizes = [2, 32], strides = [1, 1]} : vector<2x128xf32> to vector<2x32xf32>
    %625 = arith.negf %624 : vector<2x32xf32>
    %626 = math.exp %625 : vector<2x32xf32>
    %cst_147 = arith.constant 1.000000e+00 : f32
    %627 = vector.broadcast %cst_147 : f32 to vector<2x32xf32>
    %628 = arith.addf %627, %626 : vector<2x32xf32>
    %629 = arith.divf %627, %628 : vector<2x32xf32>
    %630 = arith.mulf %621, %603 : vector<2x32xf32>
    %631 = arith.mulf %615, %623 : vector<2x32xf32>
    %632 = arith.addf %630, %631 : vector<2x32xf32>
    %633 = math.tanh %632 : vector<2x32xf32>
    %634 = arith.mulf %629, %633 : vector<2x32xf32>
    %c8_148 = arith.constant 8 : index
    %c0_149 = arith.constant 0 : index
    %635 = vector.load %arg13[%c8_148, %c0_149] : memref<16x32xf32, #tpu.memory_space<vmem>>, vector<2x32xf32>
    tpu.vector_store %arg13[%c8_148, %c0_149], %634 {strides = array<i32>} : memref<16x32xf32, #tpu.memory_space<vmem>>, vector<2x32xf32>,
    %636 = vector.extract_strided_slice %487 {offsets = [10, 0], sizes = [2, 128], strides = [1, 1]} : vector<16x128xf32> to vector<2x128xf32>
    %cst_150 = arith.constant dense<0.000000e+00> : vector<2x128xf32>
    %637 = tpu.matmul %634, %488, %cst_150 {dimension_numbers = #tpu.dot_dimension_numbers<[1], [0], [0], [1], [0, 0, 1, 1], [], []>} : vector<2x32xf32>, vector<32x128xf32>, vector<2x128xf32> -> vector<2x128xf32>
    %638 = arith.addf %636, %637 : vector<2x128xf32>
    %639 = vector.extract_strided_slice %638 {offsets = [0, 0], sizes = [2, 32], strides = [1, 1]} : vector<2x128xf32> to vector<2x32xf32>
    %640 = arith.negf %639 : vector<2x32xf32>
    %641 = math.exp %640 : vector<2x32xf32>
    %cst_151 = arith.constant 1.000000e+00 : f32
    %642 = vector.broadcast %cst_151 : f32 to vector<2x32xf32>
    %643 = arith.addf %642, %641 : vector<2x32xf32>
    %644 = arith.divf %642, %643 : vector<2x32xf32>
    %645 = vector.extract_strided_slice %638 {offsets = [0, 32], sizes = [2, 32], strides = [1, 1]} : vector<2x128xf32> to vector<2x32xf32>
    %646 = arith.negf %645 : vector<2x32xf32>
    %647 = math.exp %646 : vector<2x32xf32>
    %cst_152 = arith.constant 1.000000e+00 : f32
    %648 = vector.broadcast %cst_152 : f32 to vector<2x32xf32>
    %649 = arith.addf %648, %647 : vector<2x32xf32>
    %650 = arith.divf %648, %649 : vector<2x32xf32>
    %651 = vector.extract_strided_slice %638 {offsets = [0, 64], sizes = [2, 32], strides = [1, 1]} : vector<2x128xf32> to vector<2x32xf32>
    %652 = math.tanh %651 : vector<2x32xf32>
    %653 = vector.extract_strided_slice %638 {offsets = [0, 96], sizes = [2, 32], strides = [1, 1]} : vector<2x128xf32> to vector<2x32xf32>
    %654 = arith.negf %653 : vector<2x32xf32>
    %655 = math.exp %654 : vector<2x32xf32>
    %cst_153 = arith.constant 1.000000e+00 : f32
    %656 = vector.broadcast %cst_153 : f32 to vector<2x32xf32>
    %657 = arith.addf %656, %655 : vector<2x32xf32>
    %658 = arith.divf %656, %657 : vector<2x32xf32>
    %659 = arith.mulf %650, %632 : vector<2x32xf32>
    %660 = arith.mulf %644, %652 : vector<2x32xf32>
    %661 = arith.addf %659, %660 : vector<2x32xf32>
    %662 = math.tanh %661 : vector<2x32xf32>
    %663 = arith.mulf %658, %662 : vector<2x32xf32>
    %c10_154 = arith.constant 10 : index
    %c0_155 = arith.constant 0 : index
    %664 = vector.load %arg13[%c10_154, %c0_155] : memref<16x32xf32, #tpu.memory_space<vmem>>, vector<2x32xf32>
    tpu.vector_store %arg13[%c10_154, %c0_155], %663 {strides = array<i32>} : memref<16x32xf32, #tpu.memory_space<vmem>>, vector<2x32xf32>,
    %665 = vector.extract_strided_slice %487 {offsets = [12, 0], sizes = [2, 128], strides = [1, 1]} : vector<16x128xf32> to vector<2x128xf32>
    %cst_156 = arith.constant dense<0.000000e+00> : vector<2x128xf32>
    %666 = tpu.matmul %663, %488, %cst_156 {dimension_numbers = #tpu.dot_dimension_numbers<[1], [0], [0], [1], [0, 0, 1, 1], [], []>} : vector<2x32xf32>, vector<32x128xf32>, vector<2x128xf32> -> vector<2x128xf32>
    %667 = arith.addf %665, %666 : vector<2x128xf32>
    %668 = vector.extract_strided_slice %667 {offsets = [0, 0], sizes = [2, 32], strides = [1, 1]} : vector<2x128xf32> to vector<2x32xf32>
    %669 = arith.negf %668 : vector<2x32xf32>
    %670 = math.exp %669 : vector<2x32xf32>
    %cst_157 = arith.constant 1.000000e+00 : f32
    %671 = vector.broadcast %cst_157 : f32 to vector<2x32xf32>
    %672 = arith.addf %671, %670 : vector<2x32xf32>
    %673 = arith.divf %671, %672 : vector<2x32xf32>
    %674 = vector.extract_strided_slice %667 {offsets = [0, 32], sizes = [2, 32], strides = [1, 1]} : vector<2x128xf32> to vector<2x32xf32>
    %675 = arith.negf %674 : vector<2x32xf32>
    %676 = math.exp %675 : vector<2x32xf32>
    %cst_158 = arith.constant 1.000000e+00 : f32
    %677 = vector.broadcast %cst_158 : f32 to vector<2x32xf32>
    %678 = arith.addf %677, %676 : vector<2x32xf32>
    %679 = arith.divf %677, %678 : vector<2x32xf32>
    %680 = vector.extract_strided_slice %667 {offsets = [0, 64], sizes = [2, 32], strides = [1, 1]} : vector<2x128xf32> to vector<2x32xf32>
    %681 = math.tanh %680 : vector<2x32xf32>
    %682 = vector.extract_strided_slice %667 {offsets = [0, 96], sizes = [2, 32], strides = [1, 1]} : vector<2x128xf32> to vector<2x32xf32>
    %683 = arith.negf %682 : vector<2x32xf32>
    %684 = math.exp %683 : vector<2x32xf32>
    %cst_159 = arith.constant 1.000000e+00 : f32
    %685 = vector.broadcast %cst_159 : f32 to vector<2x32xf32>
    %686 = arith.addf %685, %684 : vector<2x32xf32>
    %687 = arith.divf %685, %686 : vector<2x32xf32>
    %688 = arith.mulf %679, %661 : vector<2x32xf32>
    %689 = arith.mulf %673, %681 : vector<2x32xf32>
    %690 = arith.addf %688, %689 : vector<2x32xf32>
    %691 = math.tanh %690 : vector<2x32xf32>
    %692 = arith.mulf %687, %691 : vector<2x32xf32>
    %c12_160 = arith.constant 12 : index
    %c0_161 = arith.constant 0 : index
    %693 = vector.load %arg13[%c12_160, %c0_161] : memref<16x32xf32, #tpu.memory_space<vmem>>, vector<2x32xf32>
    tpu.vector_store %arg13[%c12_160, %c0_161], %692 {strides = array<i32>} : memref<16x32xf32, #tpu.memory_space<vmem>>, vector<2x32xf32>,
    %694 = vector.extract_strided_slice %487 {offsets = [14, 0], sizes = [2, 128], strides = [1, 1]} : vector<16x128xf32> to vector<2x128xf32>
    %cst_162 = arith.constant dense<0.000000e+00> : vector<2x128xf32>
    %695 = tpu.matmul %692, %488, %cst_162 {dimension_numbers = #tpu.dot_dimension_numbers<[1], [0], [0], [1], [0, 0, 1, 1], [], []>} : vector<2x32xf32>, vector<32x128xf32>, vector<2x128xf32> -> vector<2x128xf32>
    %696 = arith.addf %694, %695 : vector<2x128xf32>
    %697 = vector.extract_strided_slice %696 {offsets = [0, 0], sizes = [2, 32], strides = [1, 1]} : vector<2x128xf32> to vector<2x32xf32>
    %698 = arith.negf %697 : vector<2x32xf32>
    %699 = math.exp %698 : vector<2x32xf32>
    %cst_163 = arith.constant 1.000000e+00 : f32
    %700 = vector.broadcast %cst_163 : f32 to vector<2x32xf32>
    %701 = arith.addf %700, %699 : vector<2x32xf32>
    %702 = arith.divf %700, %701 : vector<2x32xf32>
    %703 = vector.extract_strided_slice %696 {offsets = [0, 32], sizes = [2, 32], strides = [1, 1]} : vector<2x128xf32> to vector<2x32xf32>
    %704 = arith.negf %703 : vector<2x32xf32>
    %705 = math.exp %704 : vector<2x32xf32>
    %cst_164 = arith.constant 1.000000e+00 : f32
    %706 = vector.broadcast %cst_164 : f32 to vector<2x32xf32>
    %707 = arith.addf %706, %705 : vector<2x32xf32>
    %708 = arith.divf %706, %707 : vector<2x32xf32>
    %709 = vector.extract_strided_slice %696 {offsets = [0, 64], sizes = [2, 32], strides = [1, 1]} : vector<2x128xf32> to vector<2x32xf32>
    %710 = math.tanh %709 : vector<2x32xf32>
    %711 = vector.extract_strided_slice %696 {offsets = [0, 96], sizes = [2, 32], strides = [1, 1]} : vector<2x128xf32> to vector<2x32xf32>
    %712 = arith.negf %711 : vector<2x32xf32>
    %713 = math.exp %712 : vector<2x32xf32>
    %cst_165 = arith.constant 1.000000e+00 : f32
    %714 = vector.broadcast %cst_165 : f32 to vector<2x32xf32>
    %715 = arith.addf %714, %713 : vector<2x32xf32>
    %716 = arith.divf %714, %715 : vector<2x32xf32>
    %717 = arith.mulf %708, %690 : vector<2x32xf32>
    %718 = arith.mulf %702, %710 : vector<2x32xf32>
    %719 = arith.addf %717, %718 : vector<2x32xf32>
    %720 = math.tanh %719 : vector<2x32xf32>
    %721 = arith.mulf %716, %720 : vector<2x32xf32>
    %c14_166 = arith.constant 14 : index
    %c0_167 = arith.constant 0 : index
    %722 = vector.load %arg13[%c14_166, %c0_167] : memref<16x32xf32, #tpu.memory_space<vmem>>, vector<2x32xf32>
    tpu.vector_store %arg13[%c14_166, %c0_167], %721 {strides = array<i32>} : memref<16x32xf32, #tpu.memory_space<vmem>>, vector<2x32xf32>,
    %c0_168 = arith.constant 0 : index
    %c0_169 = arith.constant 0 : index
    %723 = vector.load %arg13[%c0_168, %c0_169] : memref<16x32xf32, #tpu.memory_space<vmem>>, vector<16x32xf32>
    %724 = vector.extract_strided_slice %723 {offsets = [12, 0], sizes = [4, 32], strides = [1, 1]} : vector<16x32xf32> to vector<4x32xf32>
    %c0_170 = arith.constant 0 : index
    %c0_171 = arith.constant 0 : index
    %725 = vector.load %arg10[%c0_170, %c0_171] : memref<32x4xf32, #tpu.memory_space<vmem>>, vector<32x4xf32>
    %cst_172 = arith.constant dense<0.000000e+00> : vector<4x4xf32>
    %726 = tpu.matmul %724, %725, %cst_172 {dimension_numbers = #tpu.dot_dimension_numbers<[1], [0], [0], [1], [0, 0, 1, 1], [], []>} : vector<4x32xf32>, vector<32x4xf32>, vector<4x4xf32> -> vector<4x4xf32>
    %c0_173 = arith.constant 0 : index
    %c0_174 = arith.constant 0 : index
    %727 = vector.load %arg11[%c0_173, %c0_174] : memref<1x4xf32, #tpu.memory_space<vmem>>, vector<1x4xf32>
    %728 = vector.broadcast %727 : vector<1x4xf32> to vector<4x4xf32>
    %729 = arith.addf %726, %728 : vector<4x4xf32>
    %c0_175 = arith.constant 0 : index
    %c0_176 = arith.constant 0 : index
    %730 = vector.load %arg12[%c0_175, %c0_176] : memref<4x4xf32, #tpu.memory_space<vmem>>, vector<4x4xf32>
    tpu.vector_store %arg12[%c0_175, %c0_176], %729 {strides = array<i32>} : memref<4x4xf32, #tpu.memory_space<vmem>>, vector<4x4xf32>,
    return
  }
}

</mosaic_0001>

<llo_original>
// kernel: tpu_custom_call.1
$region0: #{tpu_custom_call.1}
  #allocation0 [shape = 'u32[]', space=smem, size = 0x4, offset = 0x4, fixed_abs, tag = 'smem constant byte address 0x4 - core index']
  #allocation1 [shape = 'u32[72,128]{1,0:T(1,128)}', space=vmem, size = 0x9000, scoped, tag = 'internal scratch']
  #allocation2 [shape = 'f32[16,32]{1,0:T(8,128)}', space=vmem, size = 0x2000, scoped, tag = 'scratch operand']
  %s0 = inlined_call_operand.hbm [shape: f32[16,64], index: 0, kind: input, shape index: {}]
  %s1 = inlined_call_operand.hbm [shape: f32[64,128], index: 1, kind: input, shape index: {}]
  %s2 = inlined_call_operand.vmem [shape: f32[32,128], index: 2, kind: input, shape index: {}]
  %s3 = inlined_call_operand.vmem [shape: f32[1,128], index: 3, kind: input, shape index: {}]
  %s4 = inlined_call_operand.hbm [shape: f32[32,128], index: 4, kind: input, shape index: {}]
  %s5 = inlined_call_operand.hbm [shape: f32[32,128], index: 5, kind: input, shape index: {}]
  %s6 = inlined_call_operand.vmem [shape: f32[1,128], index: 6, kind: input, shape index: {}]
  %s7 = inlined_call_operand.hbm [shape: f32[32,128], index: 7, kind: input, shape index: {}]
  %s8 = inlined_call_operand.hbm [shape: f32[32,128], index: 8, kind: input, shape index: {}]
  %s9 = inlined_call_operand.vmem [shape: f32[1,128], index: 9, kind: input, shape index: {}]
  %s10 = inlined_call_operand.vmem [shape: f32[32,4], index: 10, kind: input, shape index: {}]
  %s11 = inlined_call_operand.vmem [shape: f32[1,4], index: 11, kind: input, shape index: {}]
  %s12 = inlined_call_operand.hbm [shape: f32[4,4], index: 12, kind: output, shape index: {}]
  %s13 = sld [smem:[#allocation0]]
  $region82: #{tpu_custom_call.1} parent=0
    _
  %s15 = ssub.s32 1, %s13
  %s16 = scalar_select 0, %s15, %s13
  $region1: #{tpu_custom_call.1} parent=0
    #allocation3 [shape = 'u8[8192]{0}', space=vmem, size = 0x2000, scoped, tag = 'input window, operand 0, single buffered']
    #allocation4 [shape = 's32[1]{0}', space=sflag, size = 0x4, scoped, tag = 'scoped memory for tpu_custom_call.1']
    #allocation5 [shape = 's32[1]{0}', space=sflag, size = 0x4, scoped, tag = 'scoped memory for tpu_custom_call.1']
    #allocation6 [shape = 'u8[32768]{0}', space=vmem, size = 0x8000, scoped, tag = 'input window, operand 1, single buffered']
    #allocation7 [shape = 's32[1]{0}', space=sflag, size = 0x4, scoped, tag = 'scoped memory for tpu_custom_call.1']
    #allocation8 [shape = 'u8[16384]{0}', space=vmem, size = 0x4000, scoped, tag = 'input window, operand 4, single buffered']
    #allocation9 [shape = 'u8[16384]{0}', space=vmem, size = 0x4000, scoped, tag = 'input window, operand 5, single buffered']
    #allocation10 [shape = 's32[1]{0}', space=sflag, size = 0x4, scoped, tag = 'scoped memory for tpu_custom_call.1']
    #allocation11 [shape = 'u8[16384]{0}', space=vmem, size = 0x4000, scoped, tag = 'input window, operand 7, single buffered']
    #allocation12 [shape = 'u8[16384]{0}', space=vmem, size = 0x4000, scoped, tag = 'input window, operand 8, single buffered']
    #allocation13 [shape = 's32[1]{0}', space=sflag, size = 0x4, scoped, tag = 'scoped memory for tpu_custom_call.1']
    #allocation14 [shape = 'u8[2048]{0}', space=vmem, size = 0x800, scoped, tag = 'output window, operand 0, single buffered']
    %17 = vsyncpa [#allocation4], 0
    %18 = vsyncpa [#allocation7], 0
    %19 = vsyncpa [#allocation10], 0
    %20 = vsyncpa [#allocation13], 0
    %21 = vsyncpa [#allocation5], 0
    // Predicated region
    $region2: #{tpu_custom_call.1} parent=1 // pred_check
      _
    $region3: #{tpu_custom_call.1} parent=1 // pred_check_branch
      %23 = sbr.rel (0) target = $region5
    $region4: #{tpu_custom_call.1} parent=1 // pred_region
      %25 = vsyncadd [#allocation4], 0
      %s26 = sshll.u32 %s0, 4
      %s27 = int_to_ptr.hbm [resolvable:$true] %s26
      %s28 = sshll.u32 [#allocation3], 4
      %s29 = int_to_ptr.vmem [resolvable:$true] %s28
      %34 = dma.hbm_to_vmem [thread:$0]  %s27, 256, %s29, [#allocation4], 128, 128, 8
    $region5: #{tpu_custom_call.1} parent=1 // pred_fallthru
      _
    // Predicated region
    $region6: #{tpu_custom_call.1} parent=1 // pred_check
      _
    $region7: #{tpu_custom_call.1} parent=1 // pred_check_branch
      %36 = sbr.rel (0) target = $region9
    $region8: #{tpu_custom_call.1} parent=1 // pred_region
      %38 = vsyncadd [#allocation7], 0
      %s39 = sshll.u32 %s1, 4
      %s40 = int_to_ptr.hbm [resolvable:$true] %s39
      %s41 = sshll.u32 [#allocation6], 4
      %s42 = int_to_ptr.vmem [resolvable:$true] %s41
      %47 = dma.hbm_to_vmem [thread:$0]  %s40, 1024, %s42, [#allocation7], 128, 128, 8
    $region9: #{tpu_custom_call.1} parent=1 // pred_fallthru
      _
    // Predicated region
    $region10: #{tpu_custom_call.1} parent=1 // pred_check
      _
    $region11: #{tpu_custom_call.1} parent=1 // pred_check_branch
      %49 = sbr.rel (0) target = $region13
    $region12: #{tpu_custom_call.1} parent=1 // pred_region
      _
    $region13: #{tpu_custom_call.1} parent=1 // pred_fallthru
      _
    // Predicated region
    $region14: #{tpu_custom_call.1} parent=1 // pred_check
      _
    $region15: #{tpu_custom_call.1} parent=1 // pred_check_branch
      %51 = sbr.rel (0) target = $region17
    $region16: #{tpu_custom_call.1} parent=1 // pred_region
      _
    $region17: #{tpu_custom_call.1} parent=1 // pred_fallthru
      _
    // Predicated region
    $region18: #{tpu_custom_call.1} parent=1 // pred_check
      _
    $region19: #{tpu_custom_call.1} parent=1 // pred_check_branch
      %53 = sbr.rel (0) target = $region21
    $region20: #{tpu_custom_call.1} parent=1 // pred_region
      %55 = vsyncadd [#allocation7], 0
      %s56 = sshll.u32 %s4, 4
      %s57 = int_to_ptr.hbm [resolvable:$true] %s56
      %s58 = sshll.u32 [#allocation8], 4
      %s59 = int_to_ptr.vmem [resolvable:$true] %s58
      %64 = dma.hbm_to_vmem [thread:$0]  %s57, 512, %s59, [#allocation7], 128, 128, 8
    $region21: #{tpu_custom_call.1} parent=1 // pred_fallthru
      _
    // Predicated region
    $region22: #{tpu_custom_call.1} parent=1 // pred_check
      _
    $region23: #{tpu_custom_call.1} parent=1 // pred_check_branch
      %66 = sbr.rel (0) target = $region25
    $region24: #{tpu_custom_call.1} parent=1 // pred_region
      %68 = vsyncadd [#allocation10], 0
      %s69 = sshll.u32 %s5, 4
      %s70 = int_to_ptr.hbm [resolvable:$true] %s69
      %s71 = sshll.u32 [#allocation9], 4
      %s72 = int_to_ptr.vmem [resolvable:$true] %s71
      %77 = dma.hbm_to_vmem [thread:$0]  %s70, 512, %s72, [#allocation10], 128, 128, 8
    $region25: #{tpu_custom_call.1} parent=1 // pred_fallthru
      _
    // Predicated region
    $region26: #{tpu_custom_call.1} parent=1 // pred_check
      _
    $region27: #{tpu_custom_call.1} parent=1 // pred_check_branch
      %79 = sbr.rel (0) target = $region29
    $region28: #{tpu_custom_call.1} parent=1 // pred_region
      _
    $region29: #{tpu_custom_call.1} parent=1 // pred_fallthru
      _
    // Predicated region
    $region30: #{tpu_custom_call.1} parent=1 // pred_check
      _
    $region31: #{tpu_custom_call.1} parent=1 // pred_check_branch
      %81 = sbr.rel (0) target = $region33
    $region32: #{tpu_custom_call.1} parent=1 // pred_region
      %83 = vsyncadd [#allocation10], 0
      %s84 = sshll.u32 %s7, 4
      %s85 = int_to_ptr.hbm [resolvable:$true] %s84
      %s86 = sshll.u32 [#allocation11], 4
      %s87 = int_to_ptr.vmem [resolvable:$true] %s86
      %92 = dma.hbm_to_vmem [thread:$0]  %s85, 512, %s87, [#allocation10], 128, 128, 8
    $region33: #{tpu_custom_call.1} parent=1 // pred_fallthru
      _
    // Predicated region
    $region34: #{tpu_custom_call.1} parent=1 // pred_check
      _
    $region35: #{tpu_custom_call.1} parent=1 // pred_check_branch
      %94 = sbr.rel (0) target = $region37
    $region36: #{tpu_custom_call.1} parent=1 // pred_region
      %96 = vsyncadd [#allocation13], 0
      %s97 = sshll.u32 %s8, 4
      %s98 = int_to_ptr.hbm [resolvable:$true] %s97
      %s99 = sshll.u32 [#allocation12], 4
      %s100 = int_to_ptr.vmem [resolvable:$true] %s99
      %105 = dma.hbm_to_vmem [thread:$0]  %s98, 512, %s100, [#allocation13], 128, 128, 8
    $region37: #{tpu_custom_call.1} parent=1 // pred_fallthru
      _
    // Predicated region
    $region38: #{tpu_custom_call.1} parent=1 // pred_check
      _
    $region39: #{tpu_custom_call.1} parent=1 // pred_check_branch
      %107 = sbr.rel (0) target = $region41
    $region40: #{tpu_custom_call.1} parent=1 // pred_region
      _
    $region41: #{tpu_custom_call.1} parent=1 // pred_fallthru
      _
    // Predicated region
    $region42: #{tpu_custom_call.1} parent=1 // pred_check
      _
    $region43: #{tpu_custom_call.1} parent=1 // pred_check_branch
      %109 = sbr.rel (0) target = $region45
    $region44: #{tpu_custom_call.1} parent=1 // pred_region
      _
    $region45: #{tpu_custom_call.1} parent=1 // pred_fallthru
      _
    // Predicated region
    $region46: #{tpu_custom_call.1} parent=1 // pred_check
      _
    $region47: #{tpu_custom_call.1} parent=1 // pred_check_branch
      %111 = sbr.rel (0) target = $region49
    $region48: #{tpu_custom_call.1} parent=1 // pred_region
      _
    $region49: #{tpu_custom_call.1} parent=1 // pred_fallthru
      _
    // Predicated region
    $region50: #{tpu_custom_call.1} parent=1 // pred_check
      _
    $region51: #{tpu_custom_call.1} parent=1 // pred_check_branch
      %113 = sbr.rel (0) target = $region53
    $region52: #{tpu_custom_call.1} parent=1 // pred_region
      %115 = dma.done [#allocation4], 256
    $region53: #{tpu_custom_call.1} parent=1 // pred_fallthru
      _
    // Predicated region
    $region54: #{tpu_custom_call.1} parent=1 // pred_check
      _
    $region55: #{tpu_custom_call.1} parent=1 // pred_check_branch
      %117 = sbr.rel (0) target = $region57
    $region56: #{tpu_custom_call.1} parent=1 // pred_region
      %119 = dma.done [#allocation7], 1024
    $region57: #{tpu_custom_call.1} parent=1 // pred_fallthru
      _
    // Predicated region
    $region58: #{tpu_custom_call.1} parent=1 // pred_check
      _
    $region59: #{tpu_custom_call.1} parent=1 // pred_check_branch
      %121 = sbr.rel (0) target = $region61
    $region60: #{tpu_custom_call.1} parent=1 // pred_region
      %123 = dma.done [#allocation7], 512
    $region61: #{tpu_custom_call.1} parent=1 // pred_fallthru
      _
    // Predicated region
    $region62: #{tpu_custom_call.1} parent=1 // pred_check
      _
    $region63: #{tpu_custom_call.1} parent=1 // pred_check_branch
      %125 = sbr.rel (0) target = $region65
    $region64: #{tpu_custom_call.1} parent=1 // pred_region
      %127 = dma.done [#allocation10], 512
    $region65: #{tpu_custom_call.1} parent=1 // pred_fallthru
      _
    // Predicated region
    $region66: #{tpu_custom_call.1} parent=1 // pred_check
      _
    $region67: #{tpu_custom_call.1} parent=1 // pred_check_branch
      %129 = sbr.rel (0) target = $region69
    $region68: #{tpu_custom_call.1} parent=1 // pred_region
      %131 = dma.done [#allocation10], 512
    $region69: #{tpu_custom_call.1} parent=1 // pred_fallthru
      _
    // Predicated region
    $region70: #{tpu_custom_call.1} parent=1 // pred_check
      _
    $region71: #{tpu_custom_call.1} parent=1 // pred_check_branch
      %133 = sbr.rel (0) target = $region73
    $region72: #{tpu_custom_call.1} parent=1 // pred_region
      %135 = dma.done [#allocation13], 512
    $region73: #{tpu_custom_call.1} parent=1 // pred_fallthru
      _
    %v136 = vld [vmem:[#allocation3] sm:$0xff]
    %v137 = vld [vmem:[#allocation3 + $0x8] sm:$0xff]
    %v138 = vld [vmem:[#allocation6] sm:$0xff]
    %v139 = vld [vmem:[#allocation6 + $0x8] sm:$0xff]
    %v140 = vld [vmem:[#allocation6 + $0x10] sm:$0xff]
    %v141 = vld [vmem:[#allocation6 + $0x18] sm:$0xff]
    %v142 = vld [vmem:[#allocation6 + $0x20] sm:$0xff]
    %v143 = vld [vmem:[#allocation6 + $0x28] sm:$0xff]
    %v144 = vld [vmem:[#allocation6 + $0x30] sm:$0xff]
    %v145 = vld [vmem:[#allocation6 + $0x38] sm:$0xff]
    %v146 = vld [vmem:[%s3] sm:$0x1]
    %v148 = vperm.slane %v146, 0
    %vm150 = vcmask 523264
    %v152 = vsel %vm150, %v136, 0
    %v155 = vsel %vm150, %v137, 0
    %157 = vmatpush.msra.mxu0 0.0
    %158 = vmatpush.msra.mxu0 0.0
    %159 = vmatpush.msra.mxu0 0.0
    %160 = vmatpush.msra.mxu0 0.0
    %161 = vmatpush.msra.mxu0 0.0
    %162 = vmatpush.msra.mxu0 0.0
    %163 = vmatpush.msra.mxu0 0.0
    %164 = vmatpush.msra.mxu0 0.0
    %165 = vmatpush.msra.mxu0 %v145
    %166 = vmatpush.msra.mxu0 %v144
    %167 = vmatpush.msra.mxu0 %v143
    %168 = vmatpush.msra.mxu0 %v142
    %169 = vmatpush.msra.mxu0 %v141
    %170 = vmatpush.msra.mxu0 %v140
    %171 = vmatpush.msra.mxu0 %v139
    %172 = vmatpush.msra.mxu0 %v138
    %173 = vmatmul.f32.gmra.mxu0 %v152
    %v174 = vpop.f32.mrf.mxu0
    %v175 = vadd.f32 %v148, %v174
    %176 = vmatmul.f32.gmra.mxu0 %v155
    %v177 = vpop.f32.mrf.mxu0
    %v178 = vadd.f32 %v148, %v177
    %179 = vdwg.mxu0
    %v180 = vld [vmem:[%s2] sm:$0xff]
    %v181 = vld [vmem:[%s2 + $0x8] sm:$0xff]
    %v182 = vld [vmem:[%s2 + $0x10] sm:$0xff]
    %v183 = vld [vmem:[%s2 + $0x18] sm:$0xff]
    %vm184 = vcmask 261120
    %v186 = vsel %vm184, 0.0, 0
    %188 = vmatpush.msra.mxu0 0.0
    %189 = vmatpush.msra.mxu0 0.0
    %190 = vmatpush.msra.mxu0 0.0
    %191 = vmatpush.msra.mxu0 0.0
    %192 = vmatpush.msra.mxu0 0.0
    %193 = vmatpush.msra.mxu0 0.0
    %194 = vmatpush.msra.mxu0 0.0
    %195 = vmatpush.msra.mxu0 0.0
    %196 = vmatpush.msra.mxu0 0.0
    %197 = vmatpush.msra.mxu0 0.0
    %198 = vmatpush.msra.mxu0 0.0
    %199 = vmatpush.msra.mxu0 0.0
    %200 = vmatpush.msra.mxu0 %v183
    %201 = vmatpush.msra.mxu0 %v182
    %202 = vmatpush.msra.mxu0 %v181
    %203 = vmatpush.msra.mxu0 %v180
    %204 = vmatmul.f32.gmra.mxu0 %v186
    %v205 = vpop.f32.mrf.mxu0
    %v206 = vadd.f32 0.0, %v205
    %207 = vdwg.mxu0
    %v208 = vadd.f32 %v175, %v206
    %v209 = vxor.u32 %v208, 2147483648
    %v210 = vmul.f32 %v209, 1.442695
    %v211 = vpow.pop %v210
    %v212 = vadd.f32 %v211, 1.0
    %v213 = vrcp.pop %v212
    %v214 = vmul.f32 %v212, %v213
    %v215 = vsub.f32 1.0, %v214
    %v216 = vmul.f32 %v213, %v215
    %v217 = vadd.f32 %v213, %v216
    %vm218 = vweird.f32 %v212
    %vm219 = vweird.f32 %v213
    %vm220 = vmor %vm218, %vm219
    %v221 = vsel %vm220, %v213, %v217
    %v222 = vand.u32 2147483647, %v212
    %vm223 = vcmp.eq.f32.partialorder %v222, 8.507059e+37
    %v224 = vand.u32 %v212, 2147483648
    %v225 = vor.u32 1.1754944e-38, %v224
    %v226 = vsel %vm223, %v225, %v221
    %v227 = vmul.f32 1.0, %v226
    %v228 = vtanh.pop %v208
    %v229 = vmul.f32 %v227, 0.0
    %231 = vrot.lane.b32.xlu0 %v228, 64
    %v232 = vpop.permute.xlu0 %231
    %v234 = vmul.f32 %v227, %v232
    %236 = vrot.lane.b32.xlu0 %v234, 32
    %v237 = vpop.permute.xlu0 %236
    %v239 = vadd.f32 %v229, %v237
    %v240 = vtanh.pop %v239
    %242 = vrot.lane.b32.xlu0 %v240, 64
    %v243 = vpop.permute.xlu0 %242
    %v245 = vmul.f32 %v227, %v243
    %247 = vrot.lane.b32.xlu0 %v245, 32
    %v248 = vpop.permute.xlu0 %247
    %vm250 = vcmask 254976
    %251 = vst.msk [vmem:[#allocation2] sm:$0x3] %vm250, %v248
    %v252 = vsel %vm184, %v248, 0
    %254 = vmatpush.msra.mxu0 0.0
    %255 = vmatpush.msra.mxu0 0.0
    %256 = vmatpush.msra.mxu0 0.0
    %257 = vmatpush.msra.mxu0 0.0
    %258 = vmatpush.msra.mxu0 0.0
    %259 = vmatpush.msra.mxu0 0.0
    %260 = vmatpush.msra.mxu0 0.0
    %261 = vmatpush.msra.mxu0 0.0
    %262 = vmatpush.msra.mxu0 0.0
    %263 = vmatpush.msra.mxu0 0.0
    %264 = vmatpush.msra.mxu0 0.0
    %265 = vmatpush.msra.mxu0 0.0
    %266 = vmatpush.msra.mxu0 %v183
    %267 = vmatpush.msra.mxu0 %v182
    %268 = vmatpush.msra.mxu0 %v181
    %269 = vmatpush.msra.mxu0 %v180
    %270 = vmatmul.f32.gmra.mxu0 %v252
    %v271 = vpop.f32.mrf.mxu0
    %v272 = vadd.f32 0.0, %v271
    %273 = vdwg.mxu0
    %v275 = vrot.slane %v272, 6
    %v277 = vadd.f32 %v175, %v275
    %v278 = vxor.u32 %v277, 2147483648
    %v279 = vmul.f32 %v278, 1.442695
    %v280 = vpow.pop %v279
    %v281 = vadd.f32 %v280, 1.0
    %v282 = vrcp.pop %v281
    %v283 = vmul.f32 %v281, %v282
    %v284 = vsub.f32 1.0, %v283
    %v285 = vmul.f32 %v282, %v284
    %v286 = vadd.f32 %v282, %v285
    %vm287 = vweird.f32 %v281
    %vm288 = vweird.f32 %v282
    %vm289 = vmor %vm287, %vm288
    %v290 = vsel %vm289, %v282, %v286
    %v291 = vand.u32 2147483647, %v281
    %vm292 = vcmp.eq.f32.partialorder %v291, 8.507059e+37
    %v293 = vand.u32 %v281, 2147483648
    %v294 = vor.u32 1.1754944e-38, %v293
    %v295 = vsel %vm292, %v294, %v290
    %v296 = vmul.f32 1.0, %v295
    %v297 = vtanh.pop %v277
    %v299 = vrot.slane %v239, 6
    %v301 = vmul.f32 %v296, %v299
    %303 = vrot.lane.b32.xlu0 %v297, 64
    %v304 = vpop.permute.xlu0 %303
    %v306 = vmul.f32 %v296, %v304
    %308 = vrot.lane.b32.xlu0 %v306, 32
    %v309 = vpop.permute.xlu0 %308
    %v311 = vadd.f32 %v301, %v309
    %v312 = vtanh.pop %v311
    %314 = vrot.lane.b32.xlu0 %v312, 64
    %v315 = vpop.permute.xlu0 %314
    %v317 = vmul.f32 %v296, %v315
    %319 = vrot.lane.b32.xlu0 %v317, 32
    %v320 = vpop.permute.xlu0 %319
    %vm322 = vcmask 257026
    %323 = vst.msk [vmem:[#allocation2] sm:$0xc] %vm322, %v320
    %v324 = vrot.slane %v317, 2
    %325 = vrot.lane.b32.xlu0 %v324, 32
    %v326 = vpop.permute.xlu0 %325
    %v327 = vsel %vm184, %v326, 0
    %329 = vmatpush.msra.mxu0 0.0
    %330 = vmatpush.msra.mxu0 0.0
    %331 = vmatpush.msra.mxu0 0.0
    %332 = vmatpush.msra.mxu0 0.0
    %333 = vmatpush.msra.mxu0 0.0
    %334 = vmatpush.msra.mxu0 0.0
    %335 = vmatpush.msra.mxu0 0.0
    %336 = vmatpush.msra.mxu0 0.0
    %337 = vmatpush.msra.mxu0 0.0
    %338 = vmatpush.msra.mxu0 0.0
    %339 = vmatpush.msra.mxu0 0.0
    %340 = vmatpush.msra.mxu0 0.0
    %341 = vmatpush.msra.mxu0 %v183
    %342 = vmatpush.msra.mxu0 %v182
    %343 = vmatpush.msra.mxu0 %v181
    %344 = vmatpush.msra.mxu0 %v180
    %345 = vmatmul.f32.gmra.mxu0 %v327
    %v346 = vpop.f32.mrf.mxu0
    %v347 = vadd.f32 0.0, %v346
    %348 = vdwg.mxu0
    %v350 = vrot.slane %v347, 4
    %v352 = vadd.f32 %v175, %v350
    %v353 = vxor.u32 %v352, 2147483648
    %v354 = vmul.f32 %v353, 1.442695
    %v355 = vpow.pop %v354
    %v356 = vadd.f32 %v355, 1.0
    %v357 = vrcp.pop %v356
    %v358 = vmul.f32 %v356, %v357
    %v359 = vsub.f32 1.0, %v358
    %v360 = vmul.f32 %v357, %v359
    %v361 = vadd.f32 %v357, %v360
    %vm362 = vweird.f32 %v356
    %vm363 = vweird.f32 %v357
    %vm364 = vmor %vm362, %vm363
    %v365 = vsel %vm364, %v357, %v361
    %v366 = vand.u32 2147483647, %v356
    %vm367 = vcmp.eq.f32.partialorder %v366, 8.507059e+37
    %v368 = vand.u32 %v356, 2147483648
    %v369 = vor.u32 1.1754944e-38, %v368
    %v370 = vsel %vm367, %v369, %v365
    %v371 = vmul.f32 1.0, %v370
    %v372 = vtanh.pop %v352
    %v374 = vrot.slane %v311, 6
    %v376 = vmul.f32 %v371, %v374
    %378 = vrot.lane.b32.xlu0 %v372, 64
    %v379 = vpop.permute.xlu0 %378
    %v381 = vmul.f32 %v371, %v379
    %383 = vrot.lane.b32.xlu0 %v381, 32
    %v384 = vpop.permute.xlu0 %383
    %v386 = vadd.f32 %v376, %v384
    %v387 = vtanh.pop %v386
    %389 = vrot.lane.b32.xlu0 %v387, 64
    %v390 = vpop.permute.xlu0 %389
    %v392 = vmul.f32 %v371, %v390
    %394 = vrot.lane.b32.xlu0 %v392, 32
    %v395 = vpop.permute.xlu0 %394
    %vm397 = vcmask 259076
    %398 = vst.msk [vmem:[#allocation2] sm:$0x30] %vm397, %v395
    %v399 = vrot.slane %v392, 4
    %400 = vrot.lane.b32.xlu0 %v399, 32
    %v401 = vpop.permute.xlu0 %400
    %v402 = vsel %vm184, %v401, 0
    %404 = vmatpush.msra.mxu0 0.0
    %405 = vmatpush.msra.mxu0 0.0
    %406 = vmatpush.msra.mxu0 0.0
    %407 = vmatpush.msra.mxu0 0.0
    %408 = vmatpush.msra.mxu0 0.0
    %409 = vmatpush.msra.mxu0 0.0
    %410 = vmatpush.msra.mxu0 0.0
    %411 = vmatpush.msra.mxu0 0.0
    %412 = vmatpush.msra.mxu0 0.0
    %413 = vmatpush.msra.mxu0 0.0
    %414 = vmatpush.msra.mxu0 0.0
    %415 = vmatpush.msra.mxu0 0.0
    %416 = vmatpush.msra.mxu0 %v183
    %417 = vmatpush.msra.mxu0 %v182
    %418 = vmatpush.msra.mxu0 %v181
    %419 = vmatpush.msra.mxu0 %v180
    %420 = vmatmul.f32.gmra.mxu0 %v402
    %v421 = vpop.f32.mrf.mxu0
    %v422 = vadd.f32 0.0, %v421
    %423 = vdwg.mxu0
    %v425 = vrot.slane %v422, 2
    %v427 = vadd.f32 %v175, %v425
    %v428 = vxor.u32 %v427, 2147483648
    %v429 = vmul.f32 %v428, 1.442695
    %v430 = vpow.pop %v429
    %v431 = vadd.f32 %v430, 1.0
    %v432 = vrcp.pop %v431
    %v433 = vmul.f32 %v431, %v432
    %v434 = vsub.f32 1.0, %v433
    %v435 = vmul.f32 %v432, %v434
    %v436 = vadd.f32 %v432, %v435
    %vm437 = vweird.f32 %v431
    %vm438 = vweird.f32 %v432
    %vm439 = vmor %vm437, %vm438
    %v440 = vsel %vm439, %v432, %v436
    %v441 = vand.u32 2147483647, %v431
    %vm442 = vcmp.eq.f32.partialorder %v441, 8.507059e+37
    %v443 = vand.u32 %v431, 2147483648
    %v444 = vor.u32 1.1754944e-38, %v443
    %v445 = vsel %vm442, %v444, %v440
    %v446 = vmul.f32 1.0, %v445
    %v447 = vtanh.pop %v427
    %v449 = vrot.slane %v386, 6
    %v451 = vmul.f32 %v446, %v449
    %453 = vrot.lane.b32.xlu0 %v447, 64
    %v454 = vpop.permute.xlu0 %453
    %v456 = vmul.f32 %v446, %v454
    %458 = vrot.lane.b32.xlu0 %v456, 32
    %v459 = vpop.permute.xlu0 %458
    %v461 = vadd.f32 %v451, %v459
    %v462 = vtanh.pop %v461
    %464 = vrot.lane.b32.xlu0 %v462, 64
    %v465 = vpop.permute.xlu0 %464
    %v467 = vmul.f32 %v446, %v465
    %469 = vrot.lane.b32.xlu0 %v467, 32
    %v470 = vpop.permute.xlu0 %469
    %vm472 = vcmask 261126
    %473 = vst.msk [vmem:[#allocation2] sm:$0xc0] %vm472, %v470
    %v474 = vrot.slane %v467, 6
    %475 = vrot.lane.b32.xlu0 %v474, 32
    %v476 = vpop.permute.xlu0 %475
    %v477 = vsel %vm184, %v476, 0
    %479 = vmatpush.msra.mxu0 0.0
    %480 = vmatpush.msra.mxu0 0.0
    %481 = vmatpush.msra.mxu0 0.0
    %482 = vmatpush.msra.mxu0 0.0
    %483 = vmatpush.msra.mxu0 0.0
    %484 = vmatpush.msra.mxu0 0.0
    %485 = vmatpush.msra.mxu0 0.0
    %486 = vmatpush.msra.mxu0 0.0
    %487 = vmatpush.msra.mxu0 0.0
    %488 = vmatpush.msra.mxu0 0.0
    %489 = vmatpush.msra.mxu0 0.0
    %490 = vmatpush.msra.mxu0 0.0
    %491 = vmatpush.msra.mxu0 %v183
    %492 = vmatpush.msra.mxu0 %v182
    %493 = vmatpush.msra.mxu0 %v181
    %494 = vmatpush.msra.mxu0 %v180
    %495 = vmatmul.f32.gmra.mxu0 %v477
    %v496 = vpop.f32.mrf.mxu0
    %v497 = vadd.f32 0.0, %v496
    %498 = vdwg.mxu0
    %v499 = vadd.f32 %v178, %v497
    %v500 = vxor.u32 %v499, 2147483648
    %v501 = vmul.f32 %v500, 1.442695
    %v502 = vpow.pop %v501
    %v503 = vadd.f32 %v502, 1.0
    %v504 = vrcp.pop %v503
    %v505 = vmul.f32 %v503, %v504
    %v506 = vsub.f32 1.0, %v505
    %v507 = vmul.f32 %v504, %v506
    %v508 = vadd.f32 %v504, %v507
    %vm509 = vweird.f32 %v503
    %vm510 = vweird.f32 %v504
    %vm511 = vmor %vm509, %vm510
    %v512 = vsel %vm511, %v504, %v508
    %v513 = vand.u32 2147483647, %v503
    %vm514 = vcmp.eq.f32.partialorder %v513, 8.507059e+37
    %v515 = vand.u32 %v503, 2147483648
    %v516 = vor.u32 1.1754944e-38, %v515
    %v517 = vsel %vm514, %v516, %v512
    %v518 = vmul.f32 1.0, %v517
    %v519 = vtanh.pop %v499
    %v521 = vrot.slane %v461, 6
    %v523 = vmul.f32 %v518, %v521
    %525 = vrot.lane.b32.xlu0 %v519, 64
    %v526 = vpop.permute.xlu0 %525
    %v528 = vmul.f32 %v518, %v526
    %530 = vrot.lane.b32.xlu0 %v528, 32
    %v531 = vpop.permute.xlu0 %530
    %v533 = vadd.f32 %v523, %v531
    %v534 = vtanh.pop %v533
    %536 = vrot.lane.b32.xlu0 %v534, 64
    %v537 = vpop.permute.xlu0 %536
    %v539 = vmul.f32 %v518, %v537
    %541 = vrot.lane.b32.xlu0 %v539, 32
    %v542 = vpop.permute.xlu0 %541
    %544 = vst.msk [vmem:[#allocation2 + $0x8] sm:$0x3] %vm250, %v542
    %v545 = vsel %vm184, %v542, 0
    %547 = vmatpush.msra.mxu0 0.0
    %548 = vmatpush.msra.mxu0 0.0
    %549 = vmatpush.msra.mxu0 0.0
    %550 = vmatpush.msra.mxu0 0.0
    %551 = vmatpush.msra.mxu0 0.0
    %552 = vmatpush.msra.mxu0 0.0
    %553 = vmatpush.msra.mxu0 0.0
    %554 = vmatpush.msra.mxu0 0.0
    %555 = vmatpush.msra.mxu0 0.0
    %556 = vmatpush.msra.mxu0 0.0
    %557 = vmatpush.msra.mxu0 0.0
    %558 = vmatpush.msra.mxu0 0.0
    %559 = vmatpush.msra.mxu0 %v183
    %560 = vmatpush.msra.mxu0 %v182
    %561 = vmatpush.msra.mxu0 %v181
    %562 = vmatpush.msra.mxu0 %v180
    %563 = vmatmul.f32.gmra.mxu0 %v545
    %v564 = vpop.f32.mrf.mxu0
    %v565 = vadd.f32 0.0, %v564
    %566 = vdwg.mxu0
    %v568 = vrot.slane %v565, 6
    %v570 = vadd.f32 %v178, %v568
    %v571 = vxor.u32 %v570, 2147483648
    %v572 = vmul.f32 %v571, 1.442695
    %v573 = vpow.pop %v572
    %v574 = vadd.f32 %v573, 1.0
    %v575 = vrcp.pop %v574
    %v576 = vmul.f32 %v574, %v575
    %v577 = vsub.f32 1.0, %v576
    %v578 = vmul.f32 %v575, %v577
    %v579 = vadd.f32 %v575, %v578
    %vm580 = vweird.f32 %v574
    %vm581 = vweird.f32 %v575
    %vm582 = vmor %vm580, %vm581
    %v583 = vsel %vm582, %v575, %v579
    %v584 = vand.u32 2147483647, %v574
    %vm585 = vcmp.eq.f32.partialorder %v584, 8.507059e+37
    %v586 = vand.u32 %v574, 2147483648
    %v587 = vor.u32 1.1754944e-38, %v586
    %v588 = vsel %vm585, %v587, %v583
    %v589 = vmul.f32 1.0, %v588
    %v590 = vtanh.pop %v570
    %v592 = vrot.slane %v533, 6
    %v594 = vmul.f32 %v589, %v592
    %596 = vrot.lane.b32.xlu0 %v590, 64
    %v597 = vpop.permute.xlu0 %596
    %v599 = vmul.f32 %v589, %v597
    %601 = vrot.lane.b32.xlu0 %v599, 32
    %v602 = vpop.permute.xlu0 %601
    %v604 = vadd.f32 %v594, %v602
    %v605 = vtanh.pop %v604
    %607 = vrot.lane.b32.xlu0 %v605, 64
    %v608 = vpop.permute.xlu0 %607
    %v610 = vmul.f32 %v589, %v608
    %612 = vrot.lane.b32.xlu0 %v610, 32
    %v613 = vpop.permute.xlu0 %612
    %615 = vst.msk [vmem:[#allocation2 + $0x8] sm:$0xc] %vm322, %v613
    %v616 = vrot.slane %v610, 2
    %617 = vrot.lane.b32.xlu0 %v616, 32
    %v618 = vpop.permute.xlu0 %617
    %v619 = vsel %vm184, %v618, 0
    %621 = vmatpush.msra.mxu0 0.0
    %622 = vmatpush.msra.mxu0 0.0
    %623 = vmatpush.msra.mxu0 0.0
    %624 = vmatpush.msra.mxu0 0.0
    %625 = vmatpush.msra.mxu0 0.0
    %626 = vmatpush.msra.mxu0 0.0
    %627 = vmatpush.msra.mxu0 0.0
    %628 = vmatpush.msra.mxu0 0.0
    %629 = vmatpush.msra.mxu0 0.0
    %630 = vmatpush.msra.mxu0 0.0
    %631 = vmatpush.msra.mxu0 0.0
    %632 = vmatpush.msra.mxu0 0.0
    %633 = vmatpush.msra.mxu0 %v183
    %634 = vmatpush.msra.mxu0 %v182
    %635 = vmatpush.msra.mxu0 %v181
    %636 = vmatpush.msra.mxu0 %v180
    %637 = vmatmul.f32.gmra.mxu0 %v619
    %v638 = vpop.f32.mrf.mxu0
    %v639 = vadd.f32 0.0, %v638
    %640 = vdwg.mxu0
    %v642 = vrot.slane %v639, 4
    %v644 = vadd.f32 %v178, %v642
    %v645 = vxor.u32 %v644, 2147483648
    %v646 = vmul.f32 %v645, 1.442695
    %v647 = vpow.pop %v646
    %v648 = vadd.f32 %v647, 1.0
    %v649 = vrcp.pop %v648
    %v650 = vmul.f32 %v648, %v649
    %v651 = vsub.f32 1.0, %v650
    %v652 = vmul.f32 %v649, %v651
    %v653 = vadd.f32 %v649, %v652
    %vm654 = vweird.f32 %v648
    %vm655 = vweird.f32 %v649
    %vm656 = vmor %vm654, %vm655
    %v657 = vsel %vm656, %v649, %v653
    %v658 = vand.u32 2147483647, %v648
    %vm659 = vcmp.eq.f32.partialorder %v658, 8.507059e+37
    %v660 = vand.u32 %v648, 2147483648
    %v661 = vor.u32 1.1754944e-38, %v660
    %v662 = vsel %vm659, %v661, %v657
    %v663 = vmul.f32 1.0, %v662
    %v664 = vtanh.pop %v644
    %v666 = vrot.slane %v604, 6
    %v668 = vmul.f32 %v663, %v666
    %670 = vrot.lane.b32.xlu0 %v664, 64
    %v671 = vpop.permute.xlu0 %670
    %v673 = vmul.f32 %v663, %v671
    %675 = vrot.lane.b32.xlu0 %v673, 32
    %v676 = vpop.permute.xlu0 %675
    %v678 = vadd.f32 %v668, %v676
    %v679 = vtanh.pop %v678
    %681 = vrot.lane.b32.xlu0 %v679, 64
    %v682 = vpop.permute.xlu0 %681
    %v684 = vmul.f32 %v663, %v682
    %686 = vrot.lane.b32.xlu0 %v684, 32
    %v687 = vpop.permute.xlu0 %686
    %689 = vst.msk [vmem:[#allocation2 + $0x8] sm:$0x30] %vm397, %v687
    %v690 = vrot.slane %v684, 4
    %691 = vrot.lane.b32.xlu0 %v690, 32
    %v692 = vpop.permute.xlu0 %691
    %v693 = vsel %vm184, %v692, 0
    %695 = vmatpush.msra.mxu0 0.0
    %696 = vmatpush.msra.mxu0 0.0
    %697 = vmatpush.msra.mxu0 0.0
    %698 = vmatpush.msra.mxu0 0.0
    %699 = vmatpush.msra.mxu0 0.0
    %700 = vmatpush.msra.mxu0 0.0
    %701 = vmatpush.msra.mxu0 0.0
    %702 = vmatpush.msra.mxu0 0.0
    %703 = vmatpush.msra.mxu0 0.0
    %704 = vmatpush.msra.mxu0 0.0
    %705 = vmatpush.msra.mxu0 0.0
    %706 = vmatpush.msra.mxu0 0.0
    %707 = vmatpush.msra.mxu0 %v183
    %708 = vmatpush.msra.mxu0 %v182
    %709 = vmatpush.msra.mxu0 %v181
    %710 = vmatpush.msra.mxu0 %v180
    %711 = vmatmul.f32.gmra.mxu0 %v693
    %v712 = vpop.f32.mrf.mxu0
    %v713 = vadd.f32 0.0, %v712
    %714 = vdwg.mxu0
    %v716 = vrot.slane %v713, 2
    %v718 = vadd.f32 %v178, %v716
    %v719 = vxor.u32 %v718, 2147483648
    %v720 = vmul.f32 %v719, 1.442695
    %v721 = vpow.pop %v720
    %v722 = vadd.f32 %v721, 1.0
    %v723 = vrcp.pop %v722
    %v724 = vmul.f32 %v722, %v723
    %v725 = vsub.f32 1.0, %v724
    %v726 = vmul.f32 %v723, %v725
    %v727 = vadd.f32 %v723, %v726
    %vm728 = vweird.f32 %v722
    %vm729 = vweird.f32 %v723
    %vm730 = vmor %vm728, %vm729
    %v731 = vsel %vm730, %v723, %v727
    %v732 = vand.u32 2147483647, %v722
    %vm733 = vcmp.eq.f32.partialorder %v732, 8.507059e+37
    %v734 = vand.u32 %v722, 2147483648
    %v735 = vor.u32 1.1754944e-38, %v734
    %v736 = vsel %vm733, %v735, %v731
    %v737 = vmul.f32 1.0, %v736
    %v738 = vtanh.pop %v718
    %v740 = vrot.slane %v678, 6
    %v742 = vmul.f32 %v737, %v740
    %744 = vrot.lane.b32.xlu0 %v738, 64
    %v745 = vpop.permute.xlu0 %744
    %v747 = vmul.f32 %v737, %v745
    %749 = vrot.lane.b32.xlu0 %v747, 32
    %v750 = vpop.permute.xlu0 %749
    %v752 = vadd.f32 %v742, %v750
    %v753 = vtanh.pop %v752
    %755 = vrot.lane.b32.xlu0 %v753, 64
    %v756 = vpop.permute.xlu0 %755
    %v758 = vmul.f32 %v737, %v756
    %760 = vrot.lane.b32.xlu0 %v758, 32
    %v761 = vpop.permute.xlu0 %760
    %763 = vst.msk [vmem:[#allocation2 + $0x8] sm:$0xc0] %vm472, %v761
    %v764 = vld [vmem:[#allocation2] sm:$0xff]
    %v765 = vld [vmem:[#allocation2 + $0x8] sm:$0xff]
    %v766 = vld [vmem:[#allocation8] sm:$0xff]
    %v767 = vld [vmem:[#allocation8 + $0x8] sm:$0xff]
    %v768 = vld [vmem:[#allocation8 + $0x10] sm:$0xff]
    %v769 = vld [vmem:[#allocation8 + $0x18] sm:$0xff]
    %v770 = vld [vmem:[%s6] sm:$0x1]
    %v772 = vperm.slane %v770, 0
    %v775 = vsel %vm184, %v764, 0
    %v778 = vsel %vm184, %v765, 0
    %780 = vmatpush.msra.mxu0 0.0
    %781 = vmatpush.msra.mxu0 0.0
    %782 = vmatpush.msra.mxu0 0.0
    %783 = vmatpush.msra.mxu0 0.0
    %784 = vmatpush.msra.mxu0 0.0
    %785 = vmatpush.msra.mxu0 0.0
    %786 = vmatpush.msra.mxu0 0.0
    %787 = vmatpush.msra.mxu0 0.0
    %788 = vmatpush.msra.mxu0 0.0
    %789 = vmatpush.msra.mxu0 0.0
    %790 = vmatpush.msra.mxu0 0.0
    %791 = vmatpush.msra.mxu0 0.0
    %792 = vmatpush.msra.mxu0 %v769
    %793 = vmatpush.msra.mxu0 %v768
    %794 = vmatpush.msra.mxu0 %v767
    %795 = vmatpush.msra.mxu0 %v766
    %796 = vmatmul.f32.gmra.mxu0 %v775
    %v797 = vpop.f32.mrf.mxu0
    %v798 = vadd.f32 %v772, %v797
    %799 = vmatmul.f32.gmra.mxu0 %v778
    %v800 = vpop.f32.mrf.mxu0
    %v801 = vadd.f32 %v772, %v800
    %802 = vdwg.mxu0
    %v803 = vld [vmem:[#allocation9] sm:$0xff]
    %v804 = vld [vmem:[#allocation9 + $0x8] sm:$0xff]
    %v805 = vld [vmem:[#allocation9 + $0x10] sm:$0xff]
    %v806 = vld [vmem:[#allocation9 + $0x18] sm:$0xff]
    %807 = vmatpush.msra.mxu0 0.0
    %808 = vmatpush.msra.mxu0 0.0
    %809 = vmatpush.msra.mxu0 0.0
    %810 = vmatpush.msra.mxu0 0.0
    %811 = vmatpush.msra.mxu0 0.0
    %812 = vmatpush.msra.mxu0 0.0
    %813 = vmatpush.msra.mxu0 0.0
    %814 = vmatpush.msra.mxu0 0.0
    %815 = vmatpush.msra.mxu0 0.0
    %816 = vmatpush.msra.mxu0 0.0
    %817 = vmatpush.msra.mxu0 0.0
    %818 = vmatpush.msra.mxu0 0.0
    %819 = vmatpush.msra.mxu0 %v806
    %820 = vmatpush.msra.mxu0 %v805
    %821 = vmatpush.msra.mxu0 %v804
    %822 = vmatpush.msra.mxu0 %v803
    %823 = vmatmul.f32.gmra.mxu0 %v186
    %v824 = vpop.f32.mrf.mxu0
    %v825 = vadd.f32 0.0, %v824
    %826 = vdwg.mxu0
    %v827 = vadd.f32 %v798, %v825
    %v828 = vxor.u32 %v827, 2147483648
    %v829 = vmul.f32 %v828, 1.442695
    %v830 = vpow.pop %v829
    %v831 = vadd.f32 %v830, 1.0
    %v832 = vrcp.pop %v831
    %v833 = vmul.f32 %v831, %v832
    %v834 = vsub.f32 1.0, %v833
    %v835 = vmul.f32 %v832, %v834
    %v836 = vadd.f32 %v832, %v835
    %vm837 = vweird.f32 %v831
    %vm838 = vweird.f32 %v832
    %vm839 = vmor %vm837, %vm838
    %v840 = vsel %vm839, %v832, %v836
    %v841 = vand.u32 2147483647, %v831
    %vm842 = vcmp.eq.f32.partialorder %v841, 8.507059e+37
    %v843 = vand.u32 %v831, 2147483648
    %v844 = vor.u32 1.1754944e-38, %v843
    %v845 = vsel %vm842, %v844, %v840
    %v846 = vmul.f32 1.0, %v845
    %v847 = vtanh.pop %v827
    %v848 = vmul.f32 %v846, 0.0
    %850 = vrot.lane.b32.xlu0 %v847, 64
    %v851 = vpop.permute.xlu0 %850
    %v853 = vmul.f32 %v846, %v851
    %855 = vrot.lane.b32.xlu0 %v853, 32
    %v856 = vpop.permute.xlu0 %855
    %v858 = vadd.f32 %v848, %v856
    %v859 = vtanh.pop %v858
    %861 = vrot.lane.b32.xlu0 %v859, 64
    %v862 = vpop.permute.xlu0 %861
    %v864 = vmul.f32 %v846, %v862
    %866 = vrot.lane.b32.xlu0 %v864, 32
    %v867 = vpop.permute.xlu0 %866
    %869 = vst.msk [vmem:[#allocation2] sm:$0x3] %vm250, %v867
    %v870 = vsel %vm184, %v867, 0
    %872 = vmatpush.msra.mxu0 0.0
    %873 = vmatpush.msra.mxu0 0.0
    %874 = vmatpush.msra.mxu0 0.0
    %875 = vmatpush.msra.mxu0 0.0
    %876 = vmatpush.msra.mxu0 0.0
    %877 = vmatpush.msra.mxu0 0.0
    %878 = vmatpush.msra.mxu0 0.0
    %879 = vmatpush.msra.mxu0 0.0
    %880 = vmatpush.msra.mxu0 0.0
    %881 = vmatpush.msra.mxu0 0.0
    %882 = vmatpush.msra.mxu0 0.0
    %883 = vmatpush.msra.mxu0 0.0
    %884 = vmatpush.msra.mxu0 %v806
    %885 = vmatpush.msra.mxu0 %v805
    %886 = vmatpush.msra.mxu0 %v804
    %887 = vmatpush.msra.mxu0 %v803
    %888 = vmatmul.f32.gmra.mxu0 %v870
    %v889 = vpop.f32.mrf.mxu0
    %v890 = vadd.f32 0.0, %v889
    %891 = vdwg.mxu0
    %v893 = vrot.slane %v890, 6
    %v895 = vadd.f32 %v798, %v893
    %v896 = vxor.u32 %v895, 2147483648
    %v897 = vmul.f32 %v896, 1.442695
    %v898 = vpow.pop %v897
    %v899 = vadd.f32 %v898, 1.0
    %v900 = vrcp.pop %v899
    %v901 = vmul.f32 %v899, %v900
    %v902 = vsub.f32 1.0, %v901
    %v903 = vmul.f32 %v900, %v902
    %v904 = vadd.f32 %v900, %v903
    %vm905 = vweird.f32 %v899
    %vm906 = vweird.f32 %v900
    %vm907 = vmor %vm905, %vm906
    %v908 = vsel %vm907, %v900, %v904
    %v909 = vand.u32 2147483647, %v899
    %vm910 = vcmp.eq.f32.partialorder %v909, 8.507059e+37
    %v911 = vand.u32 %v899, 2147483648
    %v912 = vor.u32 1.1754944e-38, %v911
    %v913 = vsel %vm910, %v912, %v908
    %v914 = vmul.f32 1.0, %v913
    %v915 = vtanh.pop %v895
    %v917 = vrot.slane %v858, 6
    %v919 = vmul.f32 %v914, %v917
    %921 = vrot.lane.b32.xlu0 %v915, 64
    %v922 = vpop.permute.xlu0 %921
    %v924 = vmul.f32 %v914, %v922
    %926 = vrot.lane.b32.xlu0 %v924, 32
    %v927 = vpop.permute.xlu0 %926
    %v929 = vadd.f32 %v919, %v927
    %v930 = vtanh.pop %v929
    %932 = vrot.lane.b32.xlu0 %v930, 64
    %v933 = vpop.permute.xlu0 %932
    %v935 = vmul.f32 %v914, %v933
    %937 = vrot.lane.b32.xlu0 %v935, 32
    %v938 = vpop.permute.xlu0 %937
    %940 = vst.msk [vmem:[#allocation2] sm:$0xc] %vm322, %v938
    %v941 = vrot.slane %v935, 2
    %942 = vrot.lane.b32.xlu0 %v941, 32
    %v943 = vpop.permute.xlu0 %942
    %v944 = vsel %vm184, %v943, 0
    %946 = vmatpush.msra.mxu0 0.0
    %947 = vmatpush.msra.mxu0 0.0
    %948 = vmatpush.msra.mxu0 0.0
    %949 = vmatpush.msra.mxu0 0.0
    %950 = vmatpush.msra.mxu0 0.0
    %951 = vmatpush.msra.mxu0 0.0
    %952 = vmatpush.msra.mxu0 0.0
    %953 = vmatpush.msra.mxu0 0.0
    %954 = vmatpush.msra.mxu0 0.0
    %955 = vmatpush.msra.mxu0 0.0
    %956 = vmatpush.msra.mxu0 0.0
    %957 = vmatpush.msra.mxu0 0.0
    %958 = vmatpush.msra.mxu0 %v806
    %959 = vmatpush.msra.mxu0 %v805
    %960 = vmatpush.msra.mxu0 %v804
    %961 = vmatpush.msra.mxu0 %v803
    %962 = vmatmul.f32.gmra.mxu0 %v944
    %v963 = vpop.f32.mrf.mxu0
    %v964 = vadd.f32 0.0, %v963
    %965 = vdwg.mxu0
    %v967 = vrot.slane %v964, 4
    %v969 = vadd.f32 %v798, %v967
    %v970 = vxor.u32 %v969, 2147483648
    %v971 = vmul.f32 %v970, 1.442695
    %v972 = vpow.pop %v971
    %v973 = vadd.f32 %v972, 1.0
    %v974 = vrcp.pop %v973
    %v975 = vmul.f32 %v973, %v974
    %v976 = vsub.f32 1.0, %v975
    %v977 = vmul.f32 %v974, %v976
    %v978 = vadd.f32 %v974, %v977
    %vm979 = vweird.f32 %v973
    %vm980 = vweird.f32 %v974
    %vm981 = vmor %vm979, %vm980
    %v982 = vsel %vm981, %v974, %v978
    %v983 = vand.u32 2147483647, %v973
    %vm984 = vcmp.eq.f32.partialorder %v983, 8.507059e+37
    %v985 = vand.u32 %v973, 2147483648
    %v986 = vor.u32 1.1754944e-38, %v985
    %v987 = vsel %vm984, %v986, %v982
    %v988 = vmul.f32 1.0, %v987
    %v989 = vtanh.pop %v969
    %v991 = vrot.slane %v929, 6
    %v993 = vmul.f32 %v988, %v991
    %995 = vrot.lane.b32.xlu0 %v989, 64
    %v996 = vpop.permute.xlu0 %995
    %v998 = vmul.f32 %v988, %v996
    %1000 = vrot.lane.b32.xlu0 %v998, 32
    %v1001 = vpop.permute.xlu0 %1000
    %v1003 = vadd.f32 %v993, %v1001
    %v1004 = vtanh.pop %v1003
    %1006 = vrot.lane.b32.xlu0 %v1004, 64
    %v1007 = vpop.permute.xlu0 %1006
    %v1009 = vmul.f32 %v988, %v1007
    %1011 = vrot.lane.b32.xlu0 %v1009, 32
    %v1012 = vpop.permute.xlu0 %1011
    %1014 = vst.msk [vmem:[#allocation2] sm:$0x30] %vm397, %v1012
    %v1015 = vrot.slane %v1009, 4
    %1016 = vrot.lane.b32.xlu0 %v1015, 32
    %v1017 = vpop.permute.xlu0 %1016
    %v1018 = vsel %vm184, %v1017, 0
    %1020 = vmatpush.msra.mxu0 0.0
    %1021 = vmatpush.msra.mxu0 0.0
    %1022 = vmatpush.msra.mxu0 0.0
    %1023 = vmatpush.msra.mxu0 0.0
    %1024 = vmatpush.msra.mxu0 0.0
    %1025 = vmatpush.msra.mxu0 0.0
    %1026 = vmatpush.msra.mxu0 0.0
    %1027 = vmatpush.msra.mxu0 0.0
    %1028 = vmatpush.msra.mxu0 0.0
    %1029 = vmatpush.msra.mxu0 0.0
    %1030 = vmatpush.msra.mxu0 0.0
    %1031 = vmatpush.msra.mxu0 0.0
    %1032 = vmatpush.msra.mxu0 %v806
    %1033 = vmatpush.msra.mxu0 %v805
    %1034 = vmatpush.msra.mxu0 %v804
    %1035 = vmatpush.msra.mxu0 %v803
    %1036 = vmatmul.f32.gmra.mxu0 %v1018
    %v1037 = vpop.f32.mrf.mxu0
    %v1038 = vadd.f32 0.0, %v1037
    %1039 = vdwg.mxu0
    %v1041 = vrot.slane %v1038, 2
    %v1043 = vadd.f32 %v798, %v1041
    %v1044 = vxor.u32 %v1043, 2147483648
    %v1045 = vmul.f32 %v1044, 1.442695
    %v1046 = vpow.pop %v1045
    %v1047 = vadd.f32 %v1046, 1.0
    %v1048 = vrcp.pop %v1047
    %v1049 = vmul.f32 %v1047, %v1048
    %v1050 = vsub.f32 1.0, %v1049
    %v1051 = vmul.f32 %v1048, %v1050
    %v1052 = vadd.f32 %v1048, %v1051
    %vm1053 = vweird.f32 %v1047
    %vm1054 = vweird.f32 %v1048
    %vm1055 = vmor %vm1053, %vm1054
    %v1056 = vsel %vm1055, %v1048, %v1052
    %v1057 = vand.u32 2147483647, %v1047
    %vm1058 = vcmp.eq.f32.partialorder %v1057, 8.507059e+37
    %v1059 = vand.u32 %v1047, 2147483648
    %v1060 = vor.u32 1.1754944e-38, %v1059
    %v1061 = vsel %vm1058, %v1060, %v1056
    %v1062 = vmul.f32 1.0, %v1061
    %v1063 = vtanh.pop %v1043
    %v1065 = vrot.slane %v1003, 6
    %v1067 = vmul.f32 %v1062, %v1065
    %1069 = vrot.lane.b32.xlu0 %v1063, 64
    %v1070 = vpop.permute.xlu0 %1069
    %v1072 = vmul.f32 %v1062, %v1070
    %1074 = vrot.lane.b32.xlu0 %v1072, 32
    %v1075 = vpop.permute.xlu0 %1074
    %v1077 = vadd.f32 %v1067, %v1075
    %v1078 = vtanh.pop %v1077
    %1080 = vrot.lane.b32.xlu0 %v1078, 64
    %v1081 = vpop.permute.xlu0 %1080
    %v1083 = vmul.f32 %v1062, %v1081
    %1085 = vrot.lane.b32.xlu0 %v1083, 32
    %v1086 = vpop.permute.xlu0 %1085
    %1088 = vst.msk [vmem:[#allocation2] sm:$0xc0] %vm472, %v1086
    %v1089 = vrot.slane %v1083, 6
    %1090 = vrot.lane.b32.xlu0 %v1089, 32
    %v1091 = vpop.permute.xlu0 %1090
    %v1092 = vsel %vm184, %v1091, 0
    %1094 = vmatpush.msra.mxu0 0.0
    %1095 = vmatpush.msra.mxu0 0.0
    %1096 = vmatpush.msra.mxu0 0.0
    %1097 = vmatpush.msra.mxu0 0.0
    %1098 = vmatpush.msra.mxu0 0.0
    %1099 = vmatpush.msra.mxu0 0.0
    %1100 = vmatpush.msra.mxu0 0.0
    %1101 = vmatpush.msra.mxu0 0.0
    %1102 = vmatpush.msra.mxu0 0.0
    %1103 = vmatpush.msra.mxu0 0.0
    %1104 = vmatpush.msra.mxu0 0.0
    %1105 = vmatpush.msra.mxu0 0.0
    %1106 = vmatpush.msra.mxu0 %v806
    %1107 = vmatpush.msra.mxu0 %v805
    %1108 = vmatpush.msra.mxu0 %v804
    %1109 = vmatpush.msra.mxu0 %v803
    %1110 = vmatmul.f32.gmra.mxu0 %v1092
    %v1111 = vpop.f32.mrf.mxu0
    %v1112 = vadd.f32 0.0, %v1111
    %1113 = vdwg.mxu0
    %v1114 = vadd.f32 %v801, %v1112
    %v1115 = vxor.u32 %v1114, 2147483648
    %v1116 = vmul.f32 %v1115, 1.442695
    %v1117 = vpow.pop %v1116
    %v1118 = vadd.f32 %v1117, 1.0
    %v1119 = vrcp.pop %v1118
    %v1120 = vmul.f32 %v1118, %v1119
    %v1121 = vsub.f32 1.0, %v1120
    %v1122 = vmul.f32 %v1119, %v1121
    %v1123 = vadd.f32 %v1119, %v1122
    %vm1124 = vweird.f32 %v1118
    %vm1125 = vweird.f32 %v1119
    %vm1126 = vmor %vm1124, %vm1125
    %v1127 = vsel %vm1126, %v1119, %v1123
    %v1128 = vand.u32 2147483647, %v1118
    %vm1129 = vcmp.eq.f32.partialorder %v1128, 8.507059e+37
    %v1130 = vand.u32 %v1118, 2147483648
    %v1131 = vor.u32 1.1754944e-38, %v1130
    %v1132 = vsel %vm1129, %v1131, %v1127
    %v1133 = vmul.f32 1.0, %v1132
    %v1134 = vtanh.pop %v1114
    %v1136 = vrot.slane %v1077, 6
    %v1138 = vmul.f32 %v1133, %v1136
    %1140 = vrot.lane.b32.xlu0 %v1134, 64
    %v1141 = vpop.permute.xlu0 %1140
    %v1143 = vmul.f32 %v1133, %v1141
    %1145 = vrot.lane.b32.xlu0 %v1143, 32
    %v1146 = vpop.permute.xlu0 %1145
    %v1148 = vadd.f32 %v1138, %v1146
    %v1149 = vtanh.pop %v1148
    %1151 = vrot.lane.b32.xlu0 %v1149, 64
    %v1152 = vpop.permute.xlu0 %1151
    %v1154 = vmul.f32 %v1133, %v1152
    %1156 = vrot.lane.b32.xlu0 %v1154, 32
    %v1157 = vpop.permute.xlu0 %1156
    %1159 = vst.msk [vmem:[#allocation2 + $0x8] sm:$0x3] %vm250, %v1157
    %v1160 = vsel %vm184, %v1157, 0
    %1162 = vmatpush.msra.mxu0 0.0
    %1163 = vmatpush.msra.mxu0 0.0
    %1164 = vmatpush.msra.mxu0 0.0
    %1165 = vmatpush.msra.mxu0 0.0
    %1166 = vmatpush.msra.mxu0 0.0
    %1167 = vmatpush.msra.mxu0 0.0
    %1168 = vmatpush.msra.mxu0 0.0
    %1169 = vmatpush.msra.mxu0 0.0
    %1170 = vmatpush.msra.mxu0 0.0
    %1171 = vmatpush.msra.mxu0 0.0
    %1172 = vmatpush.msra.mxu0 0.0
    %1173 = vmatpush.msra.mxu0 0.0
    %1174 = vmatpush.msra.mxu0 %v806
    %1175 = vmatpush.msra.mxu0 %v805
    %1176 = vmatpush.msra.mxu0 %v804
    %1177 = vmatpush.msra.mxu0 %v803
    %1178 = vmatmul.f32.gmra.mxu0 %v1160
    %v1179 = vpop.f32.mrf.mxu0
    %v1180 = vadd.f32 0.0, %v1179
    %1181 = vdwg.mxu0
    %v1183 = vrot.slane %v1180, 6
    %v1185 = vadd.f32 %v801, %v1183
    %v1186 = vxor.u32 %v1185, 2147483648
    %v1187 = vmul.f32 %v1186, 1.442695
    %v1188 = vpow.pop %v1187
    %v1189 = vadd.f32 %v1188, 1.0
    %v1190 = vrcp.pop %v1189
    %v1191 = vmul.f32 %v1189, %v1190
    %v1192 = vsub.f32 1.0, %v1191
    %v1193 = vmul.f32 %v1190, %v1192
    %v1194 = vadd.f32 %v1190, %v1193
    %vm1195 = vweird.f32 %v1189
    %vm1196 = vweird.f32 %v1190
    %vm1197 = vmor %vm1195, %vm1196
    %v1198 = vsel %vm1197, %v1190, %v1194
    %v1199 = vand.u32 2147483647, %v1189
    %vm1200 = vcmp.eq.f32.partialorder %v1199, 8.507059e+37
    %v1201 = vand.u32 %v1189, 2147483648
    %v1202 = vor.u32 1.1754944e-38, %v1201
    %v1203 = vsel %vm1200, %v1202, %v1198
    %v1204 = vmul.f32 1.0, %v1203
    %v1205 = vtanh.pop %v1185
    %v1207 = vrot.slane %v1148, 6
    %v1209 = vmul.f32 %v1204, %v1207
    %1211 = vrot.lane.b32.xlu0 %v1205, 64
    %v1212 = vpop.permute.xlu0 %1211
    %v1214 = vmul.f32 %v1204, %v1212
    %1216 = vrot.lane.b32.xlu0 %v1214, 32
    %v1217 = vpop.permute.xlu0 %1216
    %v1219 = vadd.f32 %v1209, %v1217
    %v1220 = vtanh.pop %v1219
    %1222 = vrot.lane.b32.xlu0 %v1220, 64
    %v1223 = vpop.permute.xlu0 %1222
    %v1225 = vmul.f32 %v1204, %v1223
    %1227 = vrot.lane.b32.xlu0 %v1225, 32
    %v1228 = vpop.permute.xlu0 %1227
    %1230 = vst.msk [vmem:[#allocation2 + $0x8] sm:$0xc] %vm322, %v1228
    %v1231 = vrot.slane %v1225, 2
    %1232 = vrot.lane.b32.xlu0 %v1231, 32
    %v1233 = vpop.permute.xlu0 %1232
    %v1234 = vsel %vm184, %v1233, 0
    %1236 = vmatpush.msra.mxu0 0.0
    %1237 = vmatpush.msra.mxu0 0.0
    %1238 = vmatpush.msra.mxu0 0.0
    %1239 = vmatpush.msra.mxu0 0.0
    %1240 = vmatpush.msra.mxu0 0.0
    %1241 = vmatpush.msra.mxu0 0.0
    %1242 = vmatpush.msra.mxu0 0.0
    %1243 = vmatpush.msra.mxu0 0.0
    %1244 = vmatpush.msra.mxu0 0.0
    %1245 = vmatpush.msra.mxu0 0.0
    %1246 = vmatpush.msra.mxu0 0.0
    %1247 = vmatpush.msra.mxu0 0.0
    %1248 = vmatpush.msra.mxu0 %v806
    %1249 = vmatpush.msra.mxu0 %v805
    %1250 = vmatpush.msra.mxu0 %v804
    %1251 = vmatpush.msra.mxu0 %v803
    %1252 = vmatmul.f32.gmra.mxu0 %v1234
    %v1253 = vpop.f32.mrf.mxu0
    %v1254 = vadd.f32 0.0, %v1253
    %1255 = vdwg.mxu0
    %v1257 = vrot.slane %v1254, 4
    %v1259 = vadd.f32 %v801, %v1257
    %v1260 = vxor.u32 %v1259, 2147483648
    %v1261 = vmul.f32 %v1260, 1.442695
    %v1262 = vpow.pop %v1261
    %v1263 = vadd.f32 %v1262, 1.0
    %v1264 = vrcp.pop %v1263
    %v1265 = vmul.f32 %v1263, %v1264
    %v1266 = vsub.f32 1.0, %v1265
    %v1267 = vmul.f32 %v1264, %v1266
    %v1268 = vadd.f32 %v1264, %v1267
    %vm1269 = vweird.f32 %v1263
    %vm1270 = vweird.f32 %v1264
    %vm1271 = vmor %vm1269, %vm1270
    %v1272 = vsel %vm1271, %v1264, %v1268
    %v1273 = vand.u32 2147483647, %v1263
    %vm1274 = vcmp.eq.f32.partialorder %v1273, 8.507059e+37
    %v1275 = vand.u32 %v1263, 2147483648
    %v1276 = vor.u32 1.1754944e-38, %v1275
    %v1277 = vsel %vm1274, %v1276, %v1272
    %v1278 = vmul.f32 1.0, %v1277
    %v1279 = vtanh.pop %v1259
    %v1281 = vrot.slane %v1219, 6
    %v1283 = vmul.f32 %v1278, %v1281
    %1285 = vrot.lane.b32.xlu0 %v1279, 64
    %v1286 = vpop.permute.xlu0 %1285
    %v1288 = vmul.f32 %v1278, %v1286
    %1290 = vrot.lane.b32.xlu0 %v1288, 32
    %v1291 = vpop.permute.xlu0 %1290
    %v1293 = vadd.f32 %v1283, %v1291
    %v1294 = vtanh.pop %v1293
    %1296 = vrot.lane.b32.xlu0 %v1294, 64
    %v1297 = vpop.permute.xlu0 %1296
    %v1299 = vmul.f32 %v1278, %v1297
    %1301 = vrot.lane.b32.xlu0 %v1299, 32
    %v1302 = vpop.permute.xlu0 %1301
    %1304 = vst.msk [vmem:[#allocation2 + $0x8] sm:$0x30] %vm397, %v1302
    %v1305 = vrot.slane %v1299, 4
    %1306 = vrot.lane.b32.xlu0 %v1305, 32
    %v1307 = vpop.permute.xlu0 %1306
    %v1308 = vsel %vm184, %v1307, 0
    %1310 = vmatpush.msra.mxu0 0.0
    %1311 = vmatpush.msra.mxu0 0.0
    %1312 = vmatpush.msra.mxu0 0.0
    %1313 = vmatpush.msra.mxu0 0.0
    %1314 = vmatpush.msra.mxu0 0.0
    %1315 = vmatpush.msra.mxu0 0.0
    %1316 = vmatpush.msra.mxu0 0.0
    %1317 = vmatpush.msra.mxu0 0.0
    %1318 = vmatpush.msra.mxu0 0.0
    %1319 = vmatpush.msra.mxu0 0.0
    %1320 = vmatpush.msra.mxu0 0.0
    %1321 = vmatpush.msra.mxu0 0.0
    %1322 = vmatpush.msra.mxu0 %v806
    %1323 = vmatpush.msra.mxu0 %v805
    %1324 = vmatpush.msra.mxu0 %v804
    %1325 = vmatpush.msra.mxu0 %v803
    %1326 = vmatmul.f32.gmra.mxu0 %v1308
    %v1327 = vpop.f32.mrf.mxu0
    %v1328 = vadd.f32 0.0, %v1327
    %1329 = vdwg.mxu0
    %v1331 = vrot.slane %v1328, 2
    %v1333 = vadd.f32 %v801, %v1331
    %v1334 = vxor.u32 %v1333, 2147483648
    %v1335 = vmul.f32 %v1334, 1.442695
    %v1336 = vpow.pop %v1335
    %v1337 = vadd.f32 %v1336, 1.0
    %v1338 = vrcp.pop %v1337
    %v1339 = vmul.f32 %v1337, %v1338
    %v1340 = vsub.f32 1.0, %v1339
    %v1341 = vmul.f32 %v1338, %v1340
    %v1342 = vadd.f32 %v1338, %v1341
    %vm1343 = vweird.f32 %v1337
    %vm1344 = vweird.f32 %v1338
    %vm1345 = vmor %vm1343, %vm1344
    %v1346 = vsel %vm1345, %v1338, %v1342
    %v1347 = vand.u32 2147483647, %v1337
    %vm1348 = vcmp.eq.f32.partialorder %v1347, 8.507059e+37
    %v1349 = vand.u32 %v1337, 2147483648
    %v1350 = vor.u32 1.1754944e-38, %v1349
    %v1351 = vsel %vm1348, %v1350, %v1346
    %v1352 = vmul.f32 1.0, %v1351
    %v1353 = vtanh.pop %v1333
    %v1355 = vrot.slane %v1293, 6
    %v1357 = vmul.f32 %v1352, %v1355
    %1359 = vrot.lane.b32.xlu0 %v1353, 64
    %v1360 = vpop.permute.xlu0 %1359
    %v1362 = vmul.f32 %v1352, %v1360
    %1364 = vrot.lane.b32.xlu0 %v1362, 32
    %v1365 = vpop.permute.xlu0 %1364
    %v1367 = vadd.f32 %v1357, %v1365
    %v1368 = vtanh.pop %v1367
    %1370 = vrot.lane.b32.xlu0 %v1368, 64
    %v1371 = vpop.permute.xlu0 %1370
    %v1373 = vmul.f32 %v1352, %v1371
    %1375 = vrot.lane.b32.xlu0 %v1373, 32
    %v1376 = vpop.permute.xlu0 %1375
    %1378 = vst.msk [vmem:[#allocation2 + $0x8] sm:$0xc0] %vm472, %v1376
    %v1379 = vld [vmem:[#allocation2] sm:$0xff]
    %v1380 = vld [vmem:[#allocation2 + $0x8] sm:$0xff]
    %v1381 = vld [vmem:[#allocation11] sm:$0xff]
    %v1382 = vld [vmem:[#allocation11 + $0x8] sm:$0xff]
    %v1383 = vld [vmem:[#allocation11 + $0x10] sm:$0xff]
    %v1384 = vld [vmem:[#allocation11 + $0x18] sm:$0xff]
    %v1385 = vld [vmem:[%s9] sm:$0x1]
    %v1387 = vperm.slane %v1385, 0
    %v1390 = vsel %vm184, %v1379, 0
    %v1393 = vsel %vm184, %v1380, 0
    %1395 = vmatpush.msra.mxu0 0.0
    %1396 = vmatpush.msra.mxu0 0.0
    %1397 = vmatpush.msra.mxu0 0.0
    %1398 = vmatpush.msra.mxu0 0.0
    %1399 = vmatpush.msra.mxu0 0.0
    %1400 = vmatpush.msra.mxu0 0.0
    %1401 = vmatpush.msra.mxu0 0.0
    %1402 = vmatpush.msra.mxu0 0.0
    %1403 = vmatpush.msra.mxu0 0.0
    %1404 = vmatpush.msra.mxu0 0.0
    %1405 = vmatpush.msra.mxu0 0.0
    %1406 = vmatpush.msra.mxu0 0.0
    %1407 = vmatpush.msra.mxu0 %v1384
    %1408 = vmatpush.msra.mxu0 %v1383
    %1409 = vmatpush.msra.mxu0 %v1382
    %1410 = vmatpush.msra.mxu0 %v1381
    %1411 = vmatmul.f32.gmra.mxu0 %v1390
    %v1412 = vpop.f32.mrf.mxu0
    %v1413 = vadd.f32 %v1387, %v1412
    %1414 = vmatmul.f32.gmra.mxu0 %v1393
    %v1415 = vpop.f32.mrf.mxu0
    %v1416 = vadd.f32 %v1387, %v1415
    %1417 = vdwg.mxu0
    %v1418 = vld [vmem:[#allocation12] sm:$0xff]
    %v1419 = vld [vmem:[#allocation12 + $0x8] sm:$0xff]
    %v1420 = vld [vmem:[#allocation12 + $0x10] sm:$0xff]
    %v1421 = vld [vmem:[#allocation12 + $0x18] sm:$0xff]
    %1422 = vmatpush.msra.mxu0 0.0
    %1423 = vmatpush.msra.mxu0 0.0
    %1424 = vmatpush.msra.mxu0 0.0
    %1425 = vmatpush.msra.mxu0 0.0
    %1426 = vmatpush.msra.mxu0 0.0
    %1427 = vmatpush.msra.mxu0 0.0
    %1428 = vmatpush.msra.mxu0 0.0
    %1429 = vmatpush.msra.mxu0 0.0
    %1430 = vmatpush.msra.mxu0 0.0
    %1431 = vmatpush.msra.mxu0 0.0
    %1432 = vmatpush.msra.mxu0 0.0
    %1433 = vmatpush.msra.mxu0 0.0
    %1434 = vmatpush.msra.mxu0 %v1421
    %1435 = vmatpush.msra.mxu0 %v1420
    %1436 = vmatpush.msra.mxu0 %v1419
    %1437 = vmatpush.msra.mxu0 %v1418
    %1438 = vmatmul.f32.gmra.mxu0 %v186
    %v1439 = vpop.f32.mrf.mxu0
    %v1440 = vadd.f32 0.0, %v1439
    %1441 = vdwg.mxu0
    %v1442 = vadd.f32 %v1413, %v1440
    %v1443 = vxor.u32 %v1442, 2147483648
    %v1444 = vmul.f32 %v1443, 1.442695
    %v1445 = vpow.pop %v1444
    %v1446 = vadd.f32 %v1445, 1.0
    %v1447 = vrcp.pop %v1446
    %v1448 = vmul.f32 %v1446, %v1447
    %v1449 = vsub.f32 1.0, %v1448
    %v1450 = vmul.f32 %v1447, %v1449
    %v1451 = vadd.f32 %v1447, %v1450
    %vm1452 = vweird.f32 %v1446
    %vm1453 = vweird.f32 %v1447
    %vm1454 = vmor %vm1452, %vm1453
    %v1455 = vsel %vm1454, %v1447, %v1451
    %v1456 = vand.u32 2147483647, %v1446
    %vm1457 = vcmp.eq.f32.partialorder %v1456, 8.507059e+37
    %v1458 = vand.u32 %v1446, 2147483648
    %v1459 = vor.u32 1.1754944e-38, %v1458
    %v1460 = vsel %vm1457, %v1459, %v1455
    %v1461 = vmul.f32 1.0, %v1460
    %v1462 = vtanh.pop %v1442
    %v1463 = vmul.f32 %v1461, 0.0
    %1465 = vrot.lane.b32.xlu0 %v1462, 64
    %v1466 = vpop.permute.xlu0 %1465
    %v1468 = vmul.f32 %v1461, %v1466
    %1470 = vrot.lane.b32.xlu0 %v1468, 32
    %v1471 = vpop.permute.xlu0 %1470
    %v1473 = vadd.f32 %v1463, %v1471
    %v1474 = vtanh.pop %v1473
    %1476 = vrot.lane.b32.xlu0 %v1474, 64
    %v1477 = vpop.permute.xlu0 %1476
    %v1479 = vmul.f32 %v1461, %v1477
    %1481 = vrot.lane.b32.xlu0 %v1479, 32
    %v1482 = vpop.permute.xlu0 %1481
    %1484 = vst.msk [vmem:[#allocation2] sm:$0x3] %vm250, %v1482
    %v1485 = vsel %vm184, %v1482, 0
    %1487 = vmatpush.msra.mxu0 0.0
    %1488 = vmatpush.msra.mxu0 0.0
    %1489 = vmatpush.msra.mxu0 0.0
    %1490 = vmatpush.msra.mxu0 0.0
    %1491 = vmatpush.msra.mxu0 0.0
    %1492 = vmatpush.msra.mxu0 0.0
    %1493 = vmatpush.msra.mxu0 0.0
    %1494 = vmatpush.msra.mxu0 0.0
    %1495 = vmatpush.msra.mxu0 0.0
    %1496 = vmatpush.msra.mxu0 0.0
    %1497 = vmatpush.msra.mxu0 0.0
    %1498 = vmatpush.msra.mxu0 0.0
    %1499 = vmatpush.msra.mxu0 %v1421
    %1500 = vmatpush.msra.mxu0 %v1420
    %1501 = vmatpush.msra.mxu0 %v1419
    %1502 = vmatpush.msra.mxu0 %v1418
    %1503 = vmatmul.f32.gmra.mxu0 %v1485
    %v1504 = vpop.f32.mrf.mxu0
    %v1505 = vadd.f32 0.0, %v1504
    %1506 = vdwg.mxu0
    %v1508 = vrot.slane %v1505, 6
    %v1510 = vadd.f32 %v1413, %v1508
    %v1511 = vxor.u32 %v1510, 2147483648
    %v1512 = vmul.f32 %v1511, 1.442695
    %v1513 = vpow.pop %v1512
    %v1514 = vadd.f32 %v1513, 1.0
    %v1515 = vrcp.pop %v1514
    %v1516 = vmul.f32 %v1514, %v1515
    %v1517 = vsub.f32 1.0, %v1516
    %v1518 = vmul.f32 %v1515, %v1517
    %v1519 = vadd.f32 %v1515, %v1518
    %vm1520 = vweird.f32 %v1514
    %vm1521 = vweird.f32 %v1515
    %vm1522 = vmor %vm1520, %vm1521
    %v1523 = vsel %vm1522, %v1515, %v1519
    %v1524 = vand.u32 2147483647, %v1514
    %vm1525 = vcmp.eq.f32.partialorder %v1524, 8.507059e+37
    %v1526 = vand.u32 %v1514, 2147483648
    %v1527 = vor.u32 1.1754944e-38, %v1526
    %v1528 = vsel %vm1525, %v1527, %v1523
    %v1529 = vmul.f32 1.0, %v1528
    %v1530 = vtanh.pop %v1510
    %v1532 = vrot.slane %v1473, 6
    %v1534 = vmul.f32 %v1529, %v1532
    %1536 = vrot.lane.b32.xlu0 %v1530, 64
    %v1537 = vpop.permute.xlu0 %1536
    %v1539 = vmul.f32 %v1529, %v1537
    %1541 = vrot.lane.b32.xlu0 %v1539, 32
    %v1542 = vpop.permute.xlu0 %1541
    %v1544 = vadd.f32 %v1534, %v1542
    %v1545 = vtanh.pop %v1544
    %1547 = vrot.lane.b32.xlu0 %v1545, 64
    %v1548 = vpop.permute.xlu0 %1547
    %v1550 = vmul.f32 %v1529, %v1548
    %1552 = vrot.lane.b32.xlu0 %v1550, 32
    %v1553 = vpop.permute.xlu0 %1552
    %1555 = vst.msk [vmem:[#allocation2] sm:$0xc] %vm322, %v1553
    %v1556 = vrot.slane %v1550, 2
    %1557 = vrot.lane.b32.xlu0 %v1556, 32
    %v1558 = vpop.permute.xlu0 %1557
    %v1559 = vsel %vm184, %v1558, 0
    %1561 = vmatpush.msra.mxu0 0.0
    %1562 = vmatpush.msra.mxu0 0.0
    %1563 = vmatpush.msra.mxu0 0.0
    %1564 = vmatpush.msra.mxu0 0.0
    %1565 = vmatpush.msra.mxu0 0.0
    %1566 = vmatpush.msra.mxu0 0.0
    %1567 = vmatpush.msra.mxu0 0.0
    %1568 = vmatpush.msra.mxu0 0.0
    %1569 = vmatpush.msra.mxu0 0.0
    %1570 = vmatpush.msra.mxu0 0.0
    %1571 = vmatpush.msra.mxu0 0.0
    %1572 = vmatpush.msra.mxu0 0.0
    %1573 = vmatpush.msra.mxu0 %v1421
    %1574 = vmatpush.msra.mxu0 %v1420
    %1575 = vmatpush.msra.mxu0 %v1419
    %1576 = vmatpush.msra.mxu0 %v1418
    %1577 = vmatmul.f32.gmra.mxu0 %v1559
    %v1578 = vpop.f32.mrf.mxu0
    %v1579 = vadd.f32 0.0, %v1578
    %1580 = vdwg.mxu0
    %v1582 = vrot.slane %v1579, 4
    %v1584 = vadd.f32 %v1413, %v1582
    %v1585 = vxor.u32 %v1584, 2147483648
    %v1586 = vmul.f32 %v1585, 1.442695
    %v1587 = vpow.pop %v1586
    %v1588 = vadd.f32 %v1587, 1.0
    %v1589 = vrcp.pop %v1588
    %v1590 = vmul.f32 %v1588, %v1589
    %v1591 = vsub.f32 1.0, %v1590
    %v1592 = vmul.f32 %v1589, %v1591
    %v1593 = vadd.f32 %v1589, %v1592
    %vm1594 = vweird.f32 %v1588
    %vm1595 = vweird.f32 %v1589
    %vm1596 = vmor %vm1594, %vm1595
    %v1597 = vsel %vm1596, %v1589, %v1593
    %v1598 = vand.u32 2147483647, %v1588
    %vm1599 = vcmp.eq.f32.partialorder %v1598, 8.507059e+37
    %v1600 = vand.u32 %v1588, 2147483648
    %v1601 = vor.u32 1.1754944e-38, %v1600
    %v1602 = vsel %vm1599, %v1601, %v1597
    %v1603 = vmul.f32 1.0, %v1602
    %v1604 = vtanh.pop %v1584
    %v1606 = vrot.slane %v1544, 6
    %v1608 = vmul.f32 %v1603, %v1606
    %1610 = vrot.lane.b32.xlu0 %v1604, 64
    %v1611 = vpop.permute.xlu0 %1610
    %v1613 = vmul.f32 %v1603, %v1611
    %1615 = vrot.lane.b32.xlu0 %v1613, 32
    %v1616 = vpop.permute.xlu0 %1615
    %v1618 = vadd.f32 %v1608, %v1616
    %v1619 = vtanh.pop %v1618
    %1621 = vrot.lane.b32.xlu0 %v1619, 64
    %v1622 = vpop.permute.xlu0 %1621
    %v1624 = vmul.f32 %v1603, %v1622
    %1626 = vrot.lane.b32.xlu0 %v1624, 32
    %v1627 = vpop.permute.xlu0 %1626
    %1629 = vst.msk [vmem:[#allocation2] sm:$0x30] %vm397, %v1627
    %v1630 = vrot.slane %v1624, 4
    %1631 = vrot.lane.b32.xlu0 %v1630, 32
    %v1632 = vpop.permute.xlu0 %1631
    %v1633 = vsel %vm184, %v1632, 0
    %1635 = vmatpush.msra.mxu0 0.0
    %1636 = vmatpush.msra.mxu0 0.0
    %1637 = vmatpush.msra.mxu0 0.0
    %1638 = vmatpush.msra.mxu0 0.0
    %1639 = vmatpush.msra.mxu0 0.0
    %1640 = vmatpush.msra.mxu0 0.0
    %1641 = vmatpush.msra.mxu0 0.0
    %1642 = vmatpush.msra.mxu0 0.0
    %1643 = vmatpush.msra.mxu0 0.0
    %1644 = vmatpush.msra.mxu0 0.0
    %1645 = vmatpush.msra.mxu0 0.0
    %1646 = vmatpush.msra.mxu0 0.0
    %1647 = vmatpush.msra.mxu0 %v1421
    %1648 = vmatpush.msra.mxu0 %v1420
    %1649 = vmatpush.msra.mxu0 %v1419
    %1650 = vmatpush.msra.mxu0 %v1418
    %1651 = vmatmul.f32.gmra.mxu0 %v1633
    %v1652 = vpop.f32.mrf.mxu0
    %v1653 = vadd.f32 0.0, %v1652
    %1654 = vdwg.mxu0
    %v1656 = vrot.slane %v1653, 2
    %v1658 = vadd.f32 %v1413, %v1656
    %v1659 = vxor.u32 %v1658, 2147483648
    %v1660 = vmul.f32 %v1659, 1.442695
    %v1661 = vpow.pop %v1660
    %v1662 = vadd.f32 %v1661, 1.0
    %v1663 = vrcp.pop %v1662
    %v1664 = vmul.f32 %v1662, %v1663
    %v1665 = vsub.f32 1.0, %v1664
    %v1666 = vmul.f32 %v1663, %v1665
    %v1667 = vadd.f32 %v1663, %v1666
    %vm1668 = vweird.f32 %v1662
    %vm1669 = vweird.f32 %v1663
    %vm1670 = vmor %vm1668, %vm1669
    %v1671 = vsel %vm1670, %v1663, %v1667
    %v1672 = vand.u32 2147483647, %v1662
    %vm1673 = vcmp.eq.f32.partialorder %v1672, 8.507059e+37
    %v1674 = vand.u32 %v1662, 2147483648
    %v1675 = vor.u32 1.1754944e-38, %v1674
    %v1676 = vsel %vm1673, %v1675, %v1671
    %v1677 = vmul.f32 1.0, %v1676
    %v1678 = vtanh.pop %v1658
    %v1680 = vrot.slane %v1618, 6
    %v1682 = vmul.f32 %v1677, %v1680
    %1684 = vrot.lane.b32.xlu0 %v1678, 64
    %v1685 = vpop.permute.xlu0 %1684
    %v1687 = vmul.f32 %v1677, %v1685
    %1689 = vrot.lane.b32.xlu0 %v1687, 32
    %v1690 = vpop.permute.xlu0 %1689
    %v1692 = vadd.f32 %v1682, %v1690
    %v1693 = vtanh.pop %v1692
    %1695 = vrot.lane.b32.xlu0 %v1693, 64
    %v1696 = vpop.permute.xlu0 %1695
    %v1698 = vmul.f32 %v1677, %v1696
    %1700 = vrot.lane.b32.xlu0 %v1698, 32
    %v1701 = vpop.permute.xlu0 %1700
    %1703 = vst.msk [vmem:[#allocation2] sm:$0xc0] %vm472, %v1701
    %v1704 = vrot.slane %v1698, 6
    %1705 = vrot.lane.b32.xlu0 %v1704, 32
    %v1706 = vpop.permute.xlu0 %1705
    %v1707 = vsel %vm184, %v1706, 0
    %1709 = vmatpush.msra.mxu0 0.0
    %1710 = vmatpush.msra.mxu0 0.0
    %1711 = vmatpush.msra.mxu0 0.0
    %1712 = vmatpush.msra.mxu0 0.0
    %1713 = vmatpush.msra.mxu0 0.0
    %1714 = vmatpush.msra.mxu0 0.0
    %1715 = vmatpush.msra.mxu0 0.0
    %1716 = vmatpush.msra.mxu0 0.0
    %1717 = vmatpush.msra.mxu0 0.0
    %1718 = vmatpush.msra.mxu0 0.0
    %1719 = vmatpush.msra.mxu0 0.0
    %1720 = vmatpush.msra.mxu0 0.0
    %1721 = vmatpush.msra.mxu0 %v1421
    %1722 = vmatpush.msra.mxu0 %v1420
    %1723 = vmatpush.msra.mxu0 %v1419
    %1724 = vmatpush.msra.mxu0 %v1418
    %1725 = vmatmul.f32.gmra.mxu0 %v1707
    %v1726 = vpop.f32.mrf.mxu0
    %v1727 = vadd.f32 0.0, %v1726
    %1728 = vdwg.mxu0
    %v1729 = vadd.f32 %v1416, %v1727
    %v1730 = vxor.u32 %v1729, 2147483648
    %v1731 = vmul.f32 %v1730, 1.442695
    %v1732 = vpow.pop %v1731
    %v1733 = vadd.f32 %v1732, 1.0
    %v1734 = vrcp.pop %v1733
    %v1735 = vmul.f32 %v1733, %v1734
    %v1736 = vsub.f32 1.0, %v1735
    %v1737 = vmul.f32 %v1734, %v1736
    %v1738 = vadd.f32 %v1734, %v1737
    %vm1739 = vweird.f32 %v1733
    %vm1740 = vweird.f32 %v1734
    %vm1741 = vmor %vm1739, %vm1740
    %v1742 = vsel %vm1741, %v1734, %v1738
    %v1743 = vand.u32 2147483647, %v1733
    %vm1744 = vcmp.eq.f32.partialorder %v1743, 8.507059e+37
    %v1745 = vand.u32 %v1733, 2147483648
    %v1746 = vor.u32 1.1754944e-38, %v1745
    %v1747 = vsel %vm1744, %v1746, %v1742
    %v1748 = vmul.f32 1.0, %v1747
    %v1749 = vtanh.pop %v1729
    %v1751 = vrot.slane %v1692, 6
    %v1753 = vmul.f32 %v1748, %v1751
    %1755 = vrot.lane.b32.xlu0 %v1749, 64
    %v1756 = vpop.permute.xlu0 %1755
    %v1758 = vmul.f32 %v1748, %v1756
    %1760 = vrot.lane.b32.xlu0 %v1758, 32
    %v1761 = vpop.permute.xlu0 %1760
    %v1763 = vadd.f32 %v1753, %v1761
    %v1764 = vtanh.pop %v1763
    %1766 = vrot.lane.b32.xlu0 %v1764, 64
    %v1767 = vpop.permute.xlu0 %1766
    %v1769 = vmul.f32 %v1748, %v1767
    %1771 = vrot.lane.b32.xlu0 %v1769, 32
    %v1772 = vpop.permute.xlu0 %1771
    %1774 = vst.msk [vmem:[#allocation2 + $0x8] sm:$0x3] %vm250, %v1772
    %v1775 = vsel %vm184, %v1772, 0
    %1777 = vmatpush.msra.mxu0 0.0
    %1778 = vmatpush.msra.mxu0 0.0
    %1779 = vmatpush.msra.mxu0 0.0
    %1780 = vmatpush.msra.mxu0 0.0
    %1781 = vmatpush.msra.mxu0 0.0
    %1782 = vmatpush.msra.mxu0 0.0
    %1783 = vmatpush.msra.mxu0 0.0
    %1784 = vmatpush.msra.mxu0 0.0
    %1785 = vmatpush.msra.mxu0 0.0
    %1786 = vmatpush.msra.mxu0 0.0
    %1787 = vmatpush.msra.mxu0 0.0
    %1788 = vmatpush.msra.mxu0 0.0
    %1789 = vmatpush.msra.mxu0 %v1421
    %1790 = vmatpush.msra.mxu0 %v1420
    %1791 = vmatpush.msra.mxu0 %v1419
    %1792 = vmatpush.msra.mxu0 %v1418
    %1793 = vmatmul.f32.gmra.mxu0 %v1775
    %v1794 = vpop.f32.mrf.mxu0
    %v1795 = vadd.f32 0.0, %v1794
    %1796 = vdwg.mxu0
    %v1798 = vrot.slane %v1795, 6
    %v1800 = vadd.f32 %v1416, %v1798
    %v1801 = vxor.u32 %v1800, 2147483648
    %v1802 = vmul.f32 %v1801, 1.442695
    %v1803 = vpow.pop %v1802
    %v1804 = vadd.f32 %v1803, 1.0
    %v1805 = vrcp.pop %v1804
    %v1806 = vmul.f32 %v1804, %v1805
    %v1807 = vsub.f32 1.0, %v1806
    %v1808 = vmul.f32 %v1805, %v1807
    %v1809 = vadd.f32 %v1805, %v1808
    %vm1810 = vweird.f32 %v1804
    %vm1811 = vweird.f32 %v1805
    %vm1812 = vmor %vm1810, %vm1811
    %v1813 = vsel %vm1812, %v1805, %v1809
    %v1814 = vand.u32 2147483647, %v1804
    %vm1815 = vcmp.eq.f32.partialorder %v1814, 8.507059e+37
    %v1816 = vand.u32 %v1804, 2147483648
    %v1817 = vor.u32 1.1754944e-38, %v1816
    %v1818 = vsel %vm1815, %v1817, %v1813
    %v1819 = vmul.f32 1.0, %v1818
    %v1820 = vtanh.pop %v1800
    %v1822 = vrot.slane %v1763, 6
    %v1824 = vmul.f32 %v1819, %v1822
    %1826 = vrot.lane.b32.xlu0 %v1820, 64
    %v1827 = vpop.permute.xlu0 %1826
    %v1829 = vmul.f32 %v1819, %v1827
    %1831 = vrot.lane.b32.xlu0 %v1829, 32
    %v1832 = vpop.permute.xlu0 %1831
    %v1834 = vadd.f32 %v1824, %v1832
    %v1835 = vtanh.pop %v1834
    %1837 = vrot.lane.b32.xlu0 %v1835, 64
    %v1838 = vpop.permute.xlu0 %1837
    %v1840 = vmul.f32 %v1819, %v1838
    %1842 = vrot.lane.b32.xlu0 %v1840, 32
    %v1843 = vpop.permute.xlu0 %1842
    %1845 = vst.msk [vmem:[#allocation2 + $0x8] sm:$0xc] %vm322, %v1843
    %v1846 = vrot.slane %v1840, 2
    %1847 = vrot.lane.b32.xlu0 %v1846, 32
    %v1848 = vpop.permute.xlu0 %1847
    %v1849 = vsel %vm184, %v1848, 0
    %1851 = vmatpush.msra.mxu0 0.0
    %1852 = vmatpush.msra.mxu0 0.0
    %1853 = vmatpush.msra.mxu0 0.0
    %1854 = vmatpush.msra.mxu0 0.0
    %1855 = vmatpush.msra.mxu0 0.0
    %1856 = vmatpush.msra.mxu0 0.0
    %1857 = vmatpush.msra.mxu0 0.0
    %1858 = vmatpush.msra.mxu0 0.0
    %1859 = vmatpush.msra.mxu0 0.0
    %1860 = vmatpush.msra.mxu0 0.0
    %1861 = vmatpush.msra.mxu0 0.0
    %1862 = vmatpush.msra.mxu0 0.0
    %1863 = vmatpush.msra.mxu0 %v1421
    %1864 = vmatpush.msra.mxu0 %v1420
    %1865 = vmatpush.msra.mxu0 %v1419
    %1866 = vmatpush.msra.mxu0 %v1418
    %1867 = vmatmul.f32.gmra.mxu0 %v1849
    %v1868 = vpop.f32.mrf.mxu0
    %v1869 = vadd.f32 0.0, %v1868
    %1870 = vdwg.mxu0
    %v1872 = vrot.slane %v1869, 4
    %v1874 = vadd.f32 %v1416, %v1872
    %v1875 = vxor.u32 %v1874, 2147483648
    %v1876 = vmul.f32 %v1875, 1.442695
    %v1877 = vpow.pop %v1876
    %v1878 = vadd.f32 %v1877, 1.0
    %v1879 = vrcp.pop %v1878
    %v1880 = vmul.f32 %v1878, %v1879
    %v1881 = vsub.f32 1.0, %v1880
    %v1882 = vmul.f32 %v1879, %v1881
    %v1883 = vadd.f32 %v1879, %v1882
    %vm1884 = vweird.f32 %v1878
    %vm1885 = vweird.f32 %v1879
    %vm1886 = vmor %vm1884, %vm1885
    %v1887 = vsel %vm1886, %v1879, %v1883
    %v1888 = vand.u32 2147483647, %v1878
    %vm1889 = vcmp.eq.f32.partialorder %v1888, 8.507059e+37
    %v1890 = vand.u32 %v1878, 2147483648
    %v1891 = vor.u32 1.1754944e-38, %v1890
    %v1892 = vsel %vm1889, %v1891, %v1887
    %v1893 = vmul.f32 1.0, %v1892
    %v1894 = vtanh.pop %v1874
    %v1896 = vrot.slane %v1834, 6
    %v1898 = vmul.f32 %v1893, %v1896
    %1900 = vrot.lane.b32.xlu0 %v1894, 64
    %v1901 = vpop.permute.xlu0 %1900
    %v1903 = vmul.f32 %v1893, %v1901
    %1905 = vrot.lane.b32.xlu0 %v1903, 32
    %v1906 = vpop.permute.xlu0 %1905
    %v1908 = vadd.f32 %v1898, %v1906
    %v1909 = vtanh.pop %v1908
    %1911 = vrot.lane.b32.xlu0 %v1909, 64
    %v1912 = vpop.permute.xlu0 %1911
    %v1914 = vmul.f32 %v1893, %v1912
    %1916 = vrot.lane.b32.xlu0 %v1914, 32
    %v1917 = vpop.permute.xlu0 %1916
    %1919 = vst.msk [vmem:[#allocation2 + $0x8] sm:$0x30] %vm397, %v1917
    %v1920 = vrot.slane %v1914, 4
    %1921 = vrot.lane.b32.xlu0 %v1920, 32
    %v1922 = vpop.permute.xlu0 %1921
    %v1923 = vsel %vm184, %v1922, 0
    %1925 = vmatpush.msra.mxu0 0.0
    %1926 = vmatpush.msra.mxu0 0.0
    %1927 = vmatpush.msra.mxu0 0.0
    %1928 = vmatpush.msra.mxu0 0.0
    %1929 = vmatpush.msra.mxu0 0.0
    %1930 = vmatpush.msra.mxu0 0.0
    %1931 = vmatpush.msra.mxu0 0.0
    %1932 = vmatpush.msra.mxu0 0.0
    %1933 = vmatpush.msra.mxu0 0.0
    %1934 = vmatpush.msra.mxu0 0.0
    %1935 = vmatpush.msra.mxu0 0.0
    %1936 = vmatpush.msra.mxu0 0.0
    %1937 = vmatpush.msra.mxu0 %v1421
    %1938 = vmatpush.msra.mxu0 %v1420
    %1939 = vmatpush.msra.mxu0 %v1419
    %1940 = vmatpush.msra.mxu0 %v1418
    %1941 = vmatmul.f32.gmra.mxu0 %v1923
    %v1942 = vpop.f32.mrf.mxu0
    %v1943 = vadd.f32 0.0, %v1942
    %1944 = vdwg.mxu0
    %v1946 = vrot.slane %v1943, 2
    %v1948 = vadd.f32 %v1416, %v1946
    %v1949 = vxor.u32 %v1948, 2147483648
    %v1950 = vmul.f32 %v1949, 1.442695
    %v1951 = vpow.pop %v1950
    %v1952 = vadd.f32 %v1951, 1.0
    %v1953 = vrcp.pop %v1952
    %v1954 = vmul.f32 %v1952, %v1953
    %v1955 = vsub.f32 1.0, %v1954
    %v1956 = vmul.f32 %v1953, %v1955
    %v1957 = vadd.f32 %v1953, %v1956
    %vm1958 = vweird.f32 %v1952
    %vm1959 = vweird.f32 %v1953
    %vm1960 = vmor %vm1958, %vm1959
    %v1961 = vsel %vm1960, %v1953, %v1957
    %v1962 = vand.u32 2147483647, %v1952
    %vm1963 = vcmp.eq.f32.partialorder %v1962, 8.507059e+37
    %v1964 = vand.u32 %v1952, 2147483648
    %v1965 = vor.u32 1.1754944e-38, %v1964
    %v1966 = vsel %vm1963, %v1965, %v1961
    %v1967 = vmul.f32 1.0, %v1966
    %v1968 = vtanh.pop %v1948
    %v1970 = vrot.slane %v1908, 6
    %v1972 = vmul.f32 %v1967, %v1970
    %1974 = vrot.lane.b32.xlu0 %v1968, 64
    %v1975 = vpop.permute.xlu0 %1974
    %v1977 = vmul.f32 %v1967, %v1975
    %1979 = vrot.lane.b32.xlu0 %v1977, 32
    %v1980 = vpop.permute.xlu0 %1979
    %v1982 = vadd.f32 %v1972, %v1980
    %v1983 = vtanh.pop %v1982
    %1985 = vrot.lane.b32.xlu0 %v1983, 64
    %v1986 = vpop.permute.xlu0 %1985
    %v1988 = vmul.f32 %v1967, %v1986
    %1990 = vrot.lane.b32.xlu0 %v1988, 32
    %v1991 = vpop.permute.xlu0 %1990
    %1993 = vst.msk [vmem:[#allocation2 + $0x8] sm:$0xc0] %vm472, %v1991
    %v1994 = vld [vmem:[#allocation2 + $0x8] sm:$0xff]
    %v1995 = vld [vmem:[%s10] sm:$0xff]
    %v1996 = vld [vmem:[%s10 + $0x8] sm:$0xff]
    %v1997 = vld [vmem:[%s10 + $0x10] sm:$0xff]
    %v1998 = vld [vmem:[%s10 + $0x18] sm:$0xff]
    %v1999 = vld [vmem:[%s11] sm:$0x1]
    %v2001 = vperm.slane %v1999, 0
    %v2004 = vrot.slane %v1994, 4
    %v2005 = vsel %vm184, %v2004, 0
    %2007 = vmatpush.msra.mxu0 0.0
    %2008 = vmatpush.msra.mxu0 0.0
    %2009 = vmatpush.msra.mxu0 0.0
    %2010 = vmatpush.msra.mxu0 0.0
    %2011 = vmatpush.msra.mxu0 0.0
    %2012 = vmatpush.msra.mxu0 0.0
    %2013 = vmatpush.msra.mxu0 0.0
    %2014 = vmatpush.msra.mxu0 0.0
    %2015 = vmatpush.msra.mxu0 0.0
    %2016 = vmatpush.msra.mxu0 0.0
    %2017 = vmatpush.msra.mxu0 0.0
    %2018 = vmatpush.msra.mxu0 0.0
    %2019 = vmatpush.msra.mxu0 %v1998
    %2020 = vmatpush.msra.mxu0 %v1997
    %2021 = vmatpush.msra.mxu0 %v1996
    %2022 = vmatpush.msra.mxu0 %v1995
    %2023 = vmatmul.f32.gmra.mxu0 %v2005
    %v2024 = vpop.f32.mrf.mxu0
    %v2025 = vadd.f32 %v2001, %v2024
    %2026 = vdwg.mxu0
    %vm2027 = vcmask 27648
    %2028 = vst.msk [vmem:[#allocation14] sm:$0xf] %vm2027, %v2025
    // Predicated region
    $region74: #{tpu_custom_call.1} parent=1 // pred_check
      _
    $region75: #{tpu_custom_call.1} parent=1 // pred_check_branch
      %2030 = sbr.rel (0) target = $region77
    $region76: #{tpu_custom_call.1} parent=1 // pred_region
      %2032 = vsyncadd [#allocation5], 0
      %s2034 = sshll.u32 [#allocation14], 4
      %s2035 = int_to_ptr.vmem [resolvable:$true] %s2034
      %s2036 = sshll.u32 %s12, 4
      %s2037 = int_to_ptr.hbm [resolvable:$true] %s2036
      %2039 = dma.vmem_to_hbm [thread:$0]  %s2035, 64, %s2037, [#allocation5]
    $region77: #{tpu_custom_call.1} parent=1 // pred_fallthru
      _
    // Predicated region
    $region78: #{tpu_custom_call.1} parent=1 // pred_check
      _
    $region79: #{tpu_custom_call.1} parent=1 // pred_check_branch
      %2041 = sbr.rel (0) target = $region81
    $region80: #{tpu_custom_call.1} parent=1 // pred_region
      %2043 = dma.done [#allocation5], 64
    $region81: #{tpu_custom_call.1} parent=1 // pred_fallthru
      _
    %2044 = vsyncpa [#allocation4], 1
    %2045 = vsyncpa [#allocation7], 1
    %2046 = vsyncpa [#allocation10], 1
    %2047 = vsyncpa [#allocation13], 1
    %2048 = vsyncpa [#allocation5], 1

</llo_original>
